<compile_context>
chip_gen: v7x
topology: tpu7x:2x2x1
jax: 0.10.0
libtpu: 0.0.40
codegen_flags: <defaults>
</compile_context>

<pallas_src>
import math
import functools

import jax
import jax.numpy as jnp
from jax import lax
from jax.experimental import pallas as pl
from jax.experimental.pallas import tpu as pltpu


def mhsa_kernel(x_ref, gamma_ref, beta_ref,
                wqkv_ref, bqkv_ref, wo_ref, bo_ref,
                o_ref, qkv_scratch, ctx_scratch, *, num_heads, q_chunk):
    """Grid = (B, n_chunks).  One query chunk of one batch element per step.

    x_ref       : (1, S, D)   f32   (same block across the chunk axis -> fetched once per batch)
    wqkv_ref    : (D, 3D)     bf16  pre-transposed, [Wq*scale | Wk | Wv] fused
    bqkv_ref    : (1, 3D)     f32   [bq*scale | bk | bv]
    wo_ref      : (D, D)      bf16  pre-transposed
    bo_ref      : (1, D)      f32
    o_ref       : (1, TQ, D)
    qkv_scratch : (S, 3D)     bf16  persistent across chunk steps
    ctx_scratch : (TQ, D)     bf16  per-chunk head-concat buffer
    """
    S = qkv_scratch.shape[0]
    D = o_ref.shape[2]
    H = num_heads
    hd = D // H
    c = pl.program_id(1)

    # ---- once per batch element: LayerNorm + fused QKV projection into persistent bf16 scratch ----
    @pl.when(c == 0)
    def _():
        x = x_ref[0].astype(jnp.float32)                               # (S, D)
        mean = jnp.mean(x, axis=-1, keepdims=True)
        var = jnp.mean((x - mean) ** 2, axis=-1, keepdims=True)
        xn = (x - mean) * lax.rsqrt(var + 1e-5)
        xn = xn * gamma_ref[0] + beta_ref[0]
        qkv = jnp.dot(xn.astype(jnp.bfloat16), wqkv_ref[...],
                      preferred_element_type=jnp.float32)              # (S, 3D) f32 acc
        qkv = qkv + bqkv_ref[0]                                        # Q scale already in weights
        qkv_scratch[...] = qkv.astype(jnp.bfloat16)                    # single bf16 activation buffer

    # ---- this query chunk: per-head attention, ctx written into the concat scratch ----
    row0 = pl.multiple_of(c * q_chunk, q_chunk)
    for h in range(H):                                                 # static head loop (small H)
        lo = h * hd
        qh = qkv_scratch[pl.ds(row0, q_chunk), lo:lo + hd]             # (TQ, hd) bf16
        kh = qkv_scratch[:, D + lo:D + lo + hd]                        # (S,  hd) bf16
        vh = qkv_scratch[:, 2 * D + lo:2 * D + lo + hd]                # (S,  hd) bf16

        # Scores: contract last axes directly -- no transpose.
        s = lax.dot_general(qh, kh, (((1,), (1,)), ((), ())),
                            preferred_element_type=jnp.float32)        # (TQ, S) f32
        s = s - jnp.max(s, axis=-1, keepdims=True)
        p = jnp.exp(s)                                                 # unnormalized probabilities
        l = jnp.sum(p, axis=-1, keepdims=True)                         # (TQ, 1)

        ctx = jnp.dot(p.astype(jnp.bfloat16), vh,
                      preferred_element_type=jnp.float32)              # (TQ, hd) f32
        ctx = ctx * pl.reciprocal(l)                                   # deferred, exact normalization
        ctx_scratch[:, lo:lo + hd] = ctx.astype(jnp.bfloat16)

    # ---- single K=D output projection GEMM over the head-concatenated context ----
    out = jnp.dot(ctx_scratch[...], wo_ref[...],
                  preferred_element_type=jnp.float32) + bo_ref[0]      # (TQ, D) f32
    # TODO(synk): dropout is identity in eval mode; training-mode dropout would need
    #             pltpu.prng_seed / pltpu.prng_random_bits.
    o_ref[0] = out.astype(o_ref.dtype)


def _vmem_capacity_bytes():
    try:
        return pltpu.get_tpu_info().vmem_capacity_bytes
    except Exception:
        return 128 << 20


def _pick_q_chunk(S):
    """VMEM-aware query-chunk choice; prefers smaller chunks on 64 MiB (v7x-class) parts."""
    small_vmem = _vmem_capacity_bytes() <= (64 << 20)
    candidates = (256, 128, 512) if small_vmem else (512, 256, 128)
    for tq in candidates:
        if S > tq and S % tq == 0:
            return tq
    return S  # TODO(synk): pad/mask ragged S instead of whole-S fallback.


def _vmem_limit_bytes():
    """Raise the scoped-VMEM limit above the 16/32 MiB defaults, staying under physical."""
    cap = _vmem_capacity_bytes()
    return int(min(cap - (16 << 20), 100 << 20))


def multi_head_self_attention(x, params, num_heads):
    B, S, D = x.shape
    gamma, beta, wqkv, bqkv, wo, bo = params
    q_chunk = _pick_q_chunk(S)
    n_chunks = S // q_chunk

    # Grid-invariant (weight) blocks: constant index maps -> fetched once, not re-DMA'd per step.
    qkv_mat_spec = pl.BlockSpec((D, 3 * D), lambda b, c: (0, 0))
    qkv_vec_spec = pl.BlockSpec((1, 3 * D), lambda b, c: (0, 0))
    mat_spec = pl.BlockSpec((D, D), lambda b, c: (0, 0))
    vec_spec = pl.BlockSpec((1, D), lambda b, c: (0, 0))

    return pl.pallas_call(
        functools.partial(mhsa_kernel, num_heads=num_heads, q_chunk=q_chunk),
        out_shape=jax.ShapeDtypeStruct((B, S, D), x.dtype),
        grid_spec=pltpu.PrefetchScalarGridSpec(
            num_scalar_prefetch=0,
            grid=(B, n_chunks),
            in_specs=[
                pl.BlockSpec((1, S, D), lambda b, c: (b, 0, 0)),   # x (same block across chunks)
                vec_spec, vec_spec,                                # gamma, beta
                qkv_mat_spec, qkv_vec_spec,                        # wqkv (bf16), bqkv
                mat_spec, vec_spec,                                # wo (bf16), bo
            ],
            out_specs=pl.BlockSpec((1, q_chunk, D), lambda b, c: (b, c, 0)),
            scratch_shapes=[
                pltpu.VMEM((S, 3 * D), jnp.bfloat16),              # persistent QKV activations
                pltpu.VMEM((q_chunk, D), jnp.bfloat16),            # per-chunk head-concat ctx
            ],
        ),
        compiler_params=pltpu.CompilerParams(
            dimension_semantics=("parallel", "arbitrary"),
            vmem_limit_bytes=_vmem_limit_bytes()),
    )(x, gamma, beta, wqkv, bqkv, wo, bo)


def init_params(key, D, num_heads):
    """Deterministic synthetic weights. Returns (kernel_params, reference_params)."""
    ks = jax.random.split(key, 8)
    s = 1.0 / math.sqrt(D)
    hd = D // num_heads
    scale = 1.0 / math.sqrt(hd)
    gamma = jnp.ones((1, D), jnp.float32)
    beta = jnp.zeros((1, D), jnp.float32)
    wq = jax.random.uniform(ks[0], (D, D), jnp.float32, -s, s)
    wk = jax.random.uniform(ks[1], (D, D), jnp.float32, -s, s)
    wv = jax.random.uniform(ks[2], (D, D), jnp.float32, -s, s)
    bq = jax.random.uniform(ks[3], (1, D), jnp.float32, -s, s)
    bk = jax.random.uniform(ks[4], (1, D), jnp.float32, -s, s)
    bv = jax.random.uniform(ks[5], (1, D), jnp.float32, -s, s)
    wo = jax.random.uniform(ks[6], (D, D), jnp.float32, -s, s)
    bo = jax.random.uniform(ks[7], (1, D), jnp.float32, -s, s)

    # Kernel-side layouts: fused QKV weight/bias with the softmax scale folded into the Q columns
    # (one-time init cost, zero per-call cost); matmul weights stored bf16 (MXU-native operands).
    wqkv = jnp.concatenate([wq * scale, wk, wv], axis=1).astype(jnp.bfloat16)   # (D, 3D)
    bqkv = jnp.concatenate([bq * scale, bk, bv], axis=1)                        # (1, 3D) f32
    kernel_params = (gamma, beta, wqkv, bqkv, wo.astype(jnp.bfloat16), bo)
    ref_params = (gamma, beta, wq, wk, wv, bq, bk, bv, wo, bo)
    return kernel_params, ref_params


def reference(x, params, num_heads):
    """Pure-JAX f32 reference of LayerNorm + nn.MultiheadAttention forward (eval)."""
    gamma, beta, wq, wk, wv, bq, bk, bv, wo, bo = params
    B, S, D = x.shape
    hd = D // num_heads
    mean = jnp.mean(x, -1, keepdims=True)
    var = jnp.mean((x - mean) ** 2, -1, keepdims=True)
    xn = (x - mean) / jnp.sqrt(var + 1e-5) * gamma[0] + beta[0]
    q = xn @ wq + bq[0]
    k = xn @ wk + bk[0]
    v = xn @ wv + bv[0]
    q = q.reshape(B, S, num_heads, hd).transpose(0, 2, 1, 3)
    k = k.reshape(B, S, num_heads, hd).transpose(0, 2, 1, 3)
    v = v.reshape(B, S, num_heads, hd).transpose(0, 2, 1, 3)
    s = jnp.einsum("bhqd,bhkd->bhqk", q, k) / math.sqrt(hd)
    p = jax.nn.softmax(s, -1)
    ctx = jnp.einsum("bhqk,bhkd->bhqd", p, v).transpose(0, 2, 1, 3).reshape(B, S, D)
    return ctx @ wo + bo[0]


if __name__ == "__main__":
    B, S, D, H = 2, 8, 32, 4
    key = jax.random.PRNGKey(0)
    kx, kp = jax.random.split(key)
    x = jax.random.normal(kx, (B, S, D), jnp.float32)
    kernel_params, ref_params = init_params(kp, D, H)

    out = multi_head_self_attention(x, kernel_params, num_heads=H)
    out = jax.block_until_ready(out)

    ref = reference(x, ref_params, num_heads=H)
    assert out.shape == (B, S, D)
    max_err = float(jnp.max(jnp.abs(out - ref)))
    # bf16 MXU operands vs all-f32 reference => loosened tolerance.
    assert jnp.allclose(out, ref, atol=5e-2, rtol=5e-2), f"mismatch vs reference (max abs err {max_err})"
    print("KERNEL_OK")
</pallas_src>

<mosaic_0001>
module attributes {stable_mosaic.version = 11 : i64} {
  func.func @mhsa_kernel(%arg0: i32, %arg1: i32, %arg2: memref<1x8x32xf32, #tpu.memory_space<vmem>>, %arg3: memref<1x32xf32, #tpu.memory_space<vmem>>, %arg4: memref<1x32xf32, #tpu.memory_space<vmem>>, %arg5: memref<32x96xbf16, #tpu.memory_space<vmem>>, %arg6: memref<1x96xf32, #tpu.memory_space<vmem>>, %arg7: memref<32x32xbf16, #tpu.memory_space<vmem>>, %arg8: memref<1x32xf32, #tpu.memory_space<vmem>>, %arg9: memref<1x8x32xf32, #tpu.memory_space<vmem>>, %arg10: memref<8x96xbf16, #tpu.memory_space<vmem>>, %arg11: memref<8x32xbf16, #tpu.memory_space<vmem>>) attributes {dimension_semantics = [#tpu.dimension_semantics<parallel>, #tpu.dimension_semantics<arbitrary>], iteration_bounds = array<i64: 2, 1>, scalar_prefetch = 0 : i64, scratch_operands = 2 : i64, tpu.core_type = #tpu.core_type<tc>, window_params = [{transform_indices = @transform_0, window_bounds = array<i64: 1, 8, 32>}, {pipeline_mode = #tpu.pipeline_mode<synchronous>, transform_indices = @transform_1, window_bounds = array<i64: 1, 32>}, {pipeline_mode = #tpu.pipeline_mode<synchronous>, transform_indices = @transform_2, window_bounds = array<i64: 1, 32>}, {pipeline_mode = #tpu.pipeline_mode<synchronous>, transform_indices = @transform_3, window_bounds = array<i64: 32, 96>}, {pipeline_mode = #tpu.pipeline_mode<synchronous>, transform_indices = @transform_4, window_bounds = array<i64: 1, 96>}, {pipeline_mode = #tpu.pipeline_mode<synchronous>, transform_indices = @transform_5, window_bounds = array<i64: 32, 32>}, {pipeline_mode = #tpu.pipeline_mode<synchronous>, transform_indices = @transform_6, window_bounds = array<i64: 1, 32>}, {transform_indices = @transform_7, window_bounds = array<i64: 1, 8, 32>}]} {
    %c0_i32 = arith.constant 0 : i32
    %0 = arith.cmpi eq, %arg1, %c0_i32 : i32
    %1 = arith.extui %0 : i1 to i32
    %c0_i32_0 = arith.constant 0 : i32
    %2 = arith.cmpi ne, %1, %c0_i32_0 : i32
    scf.if %2 {
      %c0_42 = arith.constant 0 : index
      %c0_43 = arith.constant 0 : index
      %c0_44 = arith.constant 0 : index
      %92 = vector.load %arg2[%c0_42, %c0_43, %c0_44] : memref<1x8x32xf32, #tpu.memory_space<vmem>>, vector<1x8x32xf32>
      %93 = vector.shape_cast %92 : vector<1x8x32xf32> to vector<8x32xf32>
      %cst_45 = arith.constant dense<0.000000e+00> : vector<8xf32>
      %94 = vector.multi_reduction <add>, %93, %cst_45 [1] : vector<8x32xf32> to vector<8xf32>
      %95 = vector.shape_cast %94 : vector<8xf32> to vector<8x1xf32>
      %cst_46 = arith.constant 3.200000e+01 : f32
      %96 = vector.broadcast %cst_46 : f32 to vector<8x1xf32>
      %97 = arith.divf %95, %96 : vector<8x1xf32>
      %98 = vector.broadcast %97 : vector<8x1xf32> to vector<8x32xf32>
      %99 = arith.subf %93, %98 : vector<8x32xf32>
      %100 = arith.mulf %99, %99 : vector<8x32xf32>
      %cst_47 = arith.constant dense<0.000000e+00> : vector<8xf32>
      %101 = vector.multi_reduction <add>, %100, %cst_47 [1] : vector<8x32xf32> to vector<8xf32>
      %102 = vector.shape_cast %101 : vector<8xf32> to vector<8x1xf32>
      %cst_48 = arith.constant 3.200000e+01 : f32
      %103 = vector.broadcast %cst_48 : f32 to vector<8x1xf32>
      %104 = arith.divf %102, %103 : vector<8x1xf32>
      %105 = vector.broadcast %97 : vector<8x1xf32> to vector<8x32xf32>
      %106 = arith.subf %93, %105 : vector<8x32xf32>
      %cst_49 = arith.constant 9.99999974E-6 : f32
      %107 = vector.broadcast %cst_49 : f32 to vector<8x1xf32>
      %108 = arith.addf %104, %107 : vector<8x1xf32>
      %109 = math.rsqrt %108 : vector<8x1xf32>
      %110 = vector.broadcast %109 : vector<8x1xf32> to vector<8x32xf32>
      %111 = arith.mulf %106, %110 : vector<8x32xf32>
      %c0_50 = arith.constant 0 : index
      %c0_51 = arith.constant 0 : index
      %112 = vector.load %arg3[%c0_50, %c0_51] : memref<1x32xf32, #tpu.memory_space<vmem>>, vector<1x32xf32>
      %113 = vector.shape_cast %112 : vector<1x32xf32> to vector<32xf32>
      %114 = vector.shape_cast %113 : vector<32xf32> to vector<1x32xf32>
      %115 = vector.broadcast %114 : vector<1x32xf32> to vector<8x32xf32>
      %116 = arith.mulf %111, %115 : vector<8x32xf32>
      %c0_52 = arith.constant 0 : index
      %c0_53 = arith.constant 0 : index
      %117 = vector.load %arg4[%c0_52, %c0_53] : memref<1x32xf32, #tpu.memory_space<vmem>>, vector<1x32xf32>
      %118 = vector.shape_cast %117 : vector<1x32xf32> to vector<32xf32>
      %119 = vector.shape_cast %118 : vector<32xf32> to vector<1x32xf32>
      %120 = vector.broadcast %119 : vector<1x32xf32> to vector<8x32xf32>
      %121 = arith.addf %116, %120 : vector<8x32xf32>
      %122 = arith.truncf %121 : vector<8x32xf32> to vector<8x32xbf16>
      %c0_54 = arith.constant 0 : index
      %c0_55 = arith.constant 0 : index
      %123 = vector.load %arg5[%c0_54, %c0_55] : memref<32x96xbf16, #tpu.memory_space<vmem>>, vector<32x96xbf16>
      %cst_56 = arith.constant dense<0.000000e+00> : vector<8x96xf32>
      %124 = tpu.matmul %122, %123, %cst_56 {dimension_numbers = #tpu.dot_dimension_numbers<[1], [0], [0], [1], [0, 0, 1, 1], [], []>} : vector<8x32xbf16>, vector<32x96xbf16>, vector<8x96xf32> -> vector<8x96xf32>
      %c0_57 = arith.constant 0 : index
      %c0_58 = arith.constant 0 : index
      %125 = vector.load %arg6[%c0_57, %c0_58] : memref<1x96xf32, #tpu.memory_space<vmem>>, vector<1x96xf32>
      %126 = vector.shape_cast %125 : vector<1x96xf32> to vector<96xf32>
      %127 = vector.shape_cast %126 : vector<96xf32> to vector<1x96xf32>
      %128 = vector.broadcast %127 : vector<1x96xf32> to vector<8x96xf32>
      %129 = arith.addf %124, %128 : vector<8x96xf32>
      %130 = arith.truncf %129 : vector<8x96xf32> to vector<8x96xbf16>
      %c0_59 = arith.constant 0 : index
      %c0_60 = arith.constant 0 : index
      %131 = vector.load %arg10[%c0_59, %c0_60] : memref<8x96xbf16, #tpu.memory_space<vmem>>, vector<8x96xbf16>
      tpu.vector_store %arg10[%c0_59, %c0_60], %130 {strides = array<i32>} : memref<8x96xbf16, #tpu.memory_space<vmem>>, vector<8x96xbf16>,
    } else {
    }
    %c8_i32 = arith.constant 8 : i32
    %3 = arith.muli %arg1, %c8_i32 : i32
    %4 = tpu.assume_multiple %3, 8 : i32
    %5 = arith.index_cast %4 : i32 to index
    %c0 = arith.constant 0 : index
    %6 = vector.load %arg10[%5, %c0] : memref<8x96xbf16, #tpu.memory_space<vmem>>, vector<8x8xbf16>
    %c0_1 = arith.constant 0 : index
    %c32 = arith.constant 32 : index
    %7 = vector.load %arg10[%c0_1, %c32] : memref<8x96xbf16, #tpu.memory_space<vmem>>, vector<8x8xbf16>
    %c0_2 = arith.constant 0 : index
    %c64 = arith.constant 64 : index
    %8 = vector.load %arg10[%c0_2, %c64] : memref<8x96xbf16, #tpu.memory_space<vmem>>, vector<8x8xbf16>
    %cst = arith.constant dense<0.000000e+00> : vector<8x8xf32>
    %9 = tpu.matmul %6, %7, %cst {dimension_numbers = #tpu.dot_dimension_numbers<[1], [1], [0], [0], [0, 0, 1, 0], [], []>} : vector<8x8xbf16>, vector<8x8xbf16>, vector<8x8xf32> -> vector<8x8xf32>
    %cst_3 = arith.constant dense<0xFF800000> : vector<8xf32>
    %10 = vector.multi_reduction <maximumf>, %9, %cst_3 [1] : vector<8x8xf32> to vector<8xf32>
    %11 = vector.shape_cast %10 : vector<8xf32> to vector<8x1xf32>
    %12 = vector.broadcast %11 : vector<8x1xf32> to vector<8x8xf32>
    %13 = arith.subf %9, %12 : vector<8x8xf32>
    %14 = math.exp %13 : vector<8x8xf32>
    %cst_4 = arith.constant dense<0.000000e+00> : vector<8xf32>
    %15 = vector.multi_reduction <add>, %14, %cst_4 [1] : vector<8x8xf32> to vector<8xf32>
    %16 = vector.shape_cast %15 : vector<8xf32> to vector<8x1xf32>
    %17 = arith.truncf %14 : vector<8x8xf32> to vector<8x8xbf16>
    %cst_5 = arith.constant dense<0.000000e+00> : vector<8x8xf32>
    %18 = tpu.matmul %17, %8, %cst_5 {dimension_numbers = #tpu.dot_dimension_numbers<[1], [0], [0], [1], [0, 0, 1, 1], [], []>} : vector<8x8xbf16>, vector<8x8xbf16>, vector<8x8xf32> -> vector<8x8xf32>
    %19 = tpu.reciprocal %16 : vector<8x1xf32> -> vector<8x1xf32>
    %20 = vector.broadcast %19 : vector<8x1xf32> to vector<8x8xf32>
    %21 = arith.mulf %18, %20 : vector<8x8xf32>
    %22 = arith.truncf %21 : vector<8x8xf32> to vector<8x8xbf16>
    %c0_6 = arith.constant 0 : index
    %c0_7 = arith.constant 0 : index
    %23 = vector.load %arg11[%c0_6, %c0_7] : memref<8x32xbf16, #tpu.memory_space<vmem>>, vector<8x8xbf16>
    tpu.vector_store %arg11[%c0_6, %c0_7], %22 {strides = array<i32>} : memref<8x32xbf16, #tpu.memory_space<vmem>>, vector<8x8xbf16>,
    %24 = arith.index_cast %4 : i32 to index
    %c8 = arith.constant 8 : index
    %25 = vector.load %arg10[%24, %c8] : memref<8x96xbf16, #tpu.memory_space<vmem>>, vector<8x8xbf16>
    %c0_8 = arith.constant 0 : index
    %c40 = arith.constant 40 : index
    %26 = vector.load %arg10[%c0_8, %c40] : memref<8x96xbf16, #tpu.memory_space<vmem>>, vector<8x8xbf16>
    %c0_9 = arith.constant 0 : index
    %c72 = arith.constant 72 : index
    %27 = vector.load %arg10[%c0_9, %c72] : memref<8x96xbf16, #tpu.memory_space<vmem>>, vector<8x8xbf16>
    %cst_10 = arith.constant dense<0.000000e+00> : vector<8x8xf32>
    %28 = tpu.matmul %25, %26, %cst_10 {dimension_numbers = #tpu.dot_dimension_numbers<[1], [1], [0], [0], [0, 0, 1, 0], [], []>} : vector<8x8xbf16>, vector<8x8xbf16>, vector<8x8xf32> -> vector<8x8xf32>
    %cst_11 = arith.constant dense<0xFF800000> : vector<8xf32>
    %29 = vector.multi_reduction <maximumf>, %28, %cst_11 [1] : vector<8x8xf32> to vector<8xf32>
    %30 = vector.shape_cast %29 : vector<8xf32> to vector<8x1xf32>
    %31 = vector.broadcast %30 : vector<8x1xf32> to vector<8x8xf32>
    %32 = arith.subf %28, %31 : vector<8x8xf32>
    %33 = math.exp %32 : vector<8x8xf32>
    %cst_12 = arith.constant dense<0.000000e+00> : vector<8xf32>
    %34 = vector.multi_reduction <add>, %33, %cst_12 [1] : vector<8x8xf32> to vector<8xf32>
    %35 = vector.shape_cast %34 : vector<8xf32> to vector<8x1xf32>
    %36 = arith.truncf %33 : vector<8x8xf32> to vector<8x8xbf16>
    %cst_13 = arith.constant dense<0.000000e+00> : vector<8x8xf32>
    %37 = tpu.matmul %36, %27, %cst_13 {dimension_numbers = #tpu.dot_dimension_numbers<[1], [0], [0], [1], [0, 0, 1, 1], [], []>} : vector<8x8xbf16>, vector<8x8xbf16>, vector<8x8xf32> -> vector<8x8xf32>
    %38 = tpu.reciprocal %35 : vector<8x1xf32> -> vector<8x1xf32>
    %39 = vector.broadcast %38 : vector<8x1xf32> to vector<8x8xf32>
    %40 = arith.mulf %37, %39 : vector<8x8xf32>
    %41 = arith.truncf %40 : vector<8x8xf32> to vector<8x8xbf16>
    %c0_14 = arith.constant 0 : index
    %c8_15 = arith.constant 8 : index
    %42 = vector.load %arg11[%c0_14, %c8_15] : memref<8x32xbf16, #tpu.memory_space<vmem>>, vector<8x8xbf16>
    tpu.vector_store %arg11[%c0_14, %c8_15], %41 {strides = array<i32>} : memref<8x32xbf16, #tpu.memory_space<vmem>>, vector<8x8xbf16>,
    %43 = arith.index_cast %4 : i32 to index
    %c16 = arith.constant 16 : index
    %44 = vector.load %arg10[%43, %c16] : memref<8x96xbf16, #tpu.memory_space<vmem>>, vector<8x8xbf16>
    %c0_16 = arith.constant 0 : index
    %c48 = arith.constant 48 : index
    %45 = vector.load %arg10[%c0_16, %c48] : memref<8x96xbf16, #tpu.memory_space<vmem>>, vector<8x8xbf16>
    %c0_17 = arith.constant 0 : index
    %c80 = arith.constant 80 : index
    %46 = vector.load %arg10[%c0_17, %c80] : memref<8x96xbf16, #tpu.memory_space<vmem>>, vector<8x8xbf16>
    %cst_18 = arith.constant dense<0.000000e+00> : vector<8x8xf32>
    %47 = tpu.matmul %44, %45, %cst_18 {dimension_numbers = #tpu.dot_dimension_numbers<[1], [1], [0], [0], [0, 0, 1, 0], [], []>} : vector<8x8xbf16>, vector<8x8xbf16>, vector<8x8xf32> -> vector<8x8xf32>
    %cst_19 = arith.constant dense<0xFF800000> : vector<8xf32>
    %48 = vector.multi_reduction <maximumf>, %47, %cst_19 [1] : vector<8x8xf32> to vector<8xf32>
    %49 = vector.shape_cast %48 : vector<8xf32> to vector<8x1xf32>
    %50 = vector.broadcast %49 : vector<8x1xf32> to vector<8x8xf32>
    %51 = arith.subf %47, %50 : vector<8x8xf32>
    %52 = math.exp %51 : vector<8x8xf32>
    %cst_20 = arith.constant dense<0.000000e+00> : vector<8xf32>
    %53 = vector.multi_reduction <add>, %52, %cst_20 [1] : vector<8x8xf32> to vector<8xf32>
    %54 = vector.shape_cast %53 : vector<8xf32> to vector<8x1xf32>
    %55 = arith.truncf %52 : vector<8x8xf32> to vector<8x8xbf16>
    %cst_21 = arith.constant dense<0.000000e+00> : vector<8x8xf32>
    %56 = tpu.matmul %55, %46, %cst_21 {dimension_numbers = #tpu.dot_dimension_numbers<[1], [0], [0], [1], [0, 0, 1, 1], [], []>} : vector<8x8xbf16>, vector<8x8xbf16>, vector<8x8xf32> -> vector<8x8xf32>
    %57 = tpu.reciprocal %54 : vector<8x1xf32> -> vector<8x1xf32>
    %58 = vector.broadcast %57 : vector<8x1xf32> to vector<8x8xf32>
    %59 = arith.mulf %56, %58 : vector<8x8xf32>
    %60 = arith.truncf %59 : vector<8x8xf32> to vector<8x8xbf16>
    %c0_22 = arith.constant 0 : index
    %c16_23 = arith.constant 16 : index
    %61 = vector.load %arg11[%c0_22, %c16_23] : memref<8x32xbf16, #tpu.memory_space<vmem>>, vector<8x8xbf16>
    tpu.vector_store %arg11[%c0_22, %c16_23], %60 {strides = array<i32>} : memref<8x32xbf16, #tpu.memory_space<vmem>>, vector<8x8xbf16>,
    %62 = arith.index_cast %4 : i32 to index
    %c24 = arith.constant 24 : index
    %63 = vector.load %arg10[%62, %c24] : memref<8x96xbf16, #tpu.memory_space<vmem>>, vector<8x8xbf16>
    %c0_24 = arith.constant 0 : index
    %c56 = arith.constant 56 : index
    %64 = vector.load %arg10[%c0_24, %c56] : memref<8x96xbf16, #tpu.memory_space<vmem>>, vector<8x8xbf16>
    %c0_25 = arith.constant 0 : index
    %c88 = arith.constant 88 : index
    %65 = vector.load %arg10[%c0_25, %c88] : memref<8x96xbf16, #tpu.memory_space<vmem>>, vector<8x8xbf16>
    %cst_26 = arith.constant dense<0.000000e+00> : vector<8x8xf32>
    %66 = tpu.matmul %63, %64, %cst_26 {dimension_numbers = #tpu.dot_dimension_numbers<[1], [1], [0], [0], [0, 0, 1, 0], [], []>} : vector<8x8xbf16>, vector<8x8xbf16>, vector<8x8xf32> -> vector<8x8xf32>
    %cst_27 = arith.constant dense<0xFF800000> : vector<8xf32>
    %67 = vector.multi_reduction <maximumf>, %66, %cst_27 [1] : vector<8x8xf32> to vector<8xf32>
    %68 = vector.shape_cast %67 : vector<8xf32> to vector<8x1xf32>
    %69 = vector.broadcast %68 : vector<8x1xf32> to vector<8x8xf32>
    %70 = arith.subf %66, %69 : vector<8x8xf32>
    %71 = math.exp %70 : vector<8x8xf32>
    %cst_28 = arith.constant dense<0.000000e+00> : vector<8xf32>
    %72 = vector.multi_reduction <add>, %71, %cst_28 [1] : vector<8x8xf32> to vector<8xf32>
    %73 = vector.shape_cast %72 : vector<8xf32> to vector<8x1xf32>
    %74 = arith.truncf %71 : vector<8x8xf32> to vector<8x8xbf16>
    %cst_29 = arith.constant dense<0.000000e+00> : vector<8x8xf32>
    %75 = tpu.matmul %74, %65, %cst_29 {dimension_numbers = #tpu.dot_dimension_numbers<[1], [0], [0], [1], [0, 0, 1, 1], [], []>} : vector<8x8xbf16>, vector<8x8xbf16>, vector<8x8xf32> -> vector<8x8xf32>
    %76 = tpu.reciprocal %73 : vector<8x1xf32> -> vector<8x1xf32>
    %77 = vector.broadcast %76 : vector<8x1xf32> to vector<8x8xf32>
    %78 = arith.mulf %75, %77 : vector<8x8xf32>
    %79 = arith.truncf %78 : vector<8x8xf32> to vector<8x8xbf16>
    %c0_30 = arith.constant 0 : index
    %c24_31 = arith.constant 24 : index
    %80 = vector.load %arg11[%c0_30, %c24_31] : memref<8x32xbf16, #tpu.memory_space<vmem>>, vector<8x8xbf16>
    tpu.vector_store %arg11[%c0_30, %c24_31], %79 {strides = array<i32>} : memref<8x32xbf16, #tpu.memory_space<vmem>>, vector<8x8xbf16>,
    %c0_32 = arith.constant 0 : index
    %c0_33 = arith.constant 0 : index
    %81 = vector.load %arg11[%c0_32, %c0_33] : memref<8x32xbf16, #tpu.memory_space<vmem>>, vector<8x32xbf16>
    %c0_34 = arith.constant 0 : index
    %c0_35 = arith.constant 0 : index
    %82 = vector.load %arg7[%c0_34, %c0_35] : memref<32x32xbf16, #tpu.memory_space<vmem>>, vector<32x32xbf16>
    %cst_36 = arith.constant dense<0.000000e+00> : vector<8x32xf32>
    %83 = tpu.matmul %81, %82, %cst_36 {dimension_numbers = #tpu.dot_dimension_numbers<[1], [0], [0], [1], [0, 0, 1, 1], [], []>} : vector<8x32xbf16>, vector<32x32xbf16>, vector<8x32xf32> -> vector<8x32xf32>
    %c0_37 = arith.constant 0 : index
    %c0_38 = arith.constant 0 : index
    %84 = vector.load %arg8[%c0_37, %c0_38] : memref<1x32xf32, #tpu.memory_space<vmem>>, vector<1x32xf32>
    %85 = vector.shape_cast %84 : vector<1x32xf32> to vector<32xf32>
    %86 = vector.shape_cast %85 : vector<32xf32> to vector<1x32xf32>
    %87 = vector.broadcast %86 : vector<1x32xf32> to vector<8x32xf32>
    %88 = arith.addf %83, %87 : vector<8x32xf32>
    %c0_39 = arith.constant 0 : index
    %c0_40 = arith.constant 0 : index
    %c0_41 = arith.constant 0 : index
    %89 = vector.load %arg9[%c0_39, %c0_40, %c0_41] : memref<1x8x32xf32, #tpu.memory_space<vmem>>, vector<1x8x32xf32>
    %90 = vector.shape_cast %89 : vector<1x8x32xf32> to vector<8x32xf32>
    %91 = vector.shape_cast %88 : vector<8x32xf32> to vector<1x8x32xf32>
    tpu.vector_store %arg9[%c0_39, %c0_40, %c0_41], %91 {strides = array<i32>} : memref<1x8x32xf32, #tpu.memory_space<vmem>>, vector<1x8x32xf32>,
    return
  }
  func.func @transform_0(%arg0: i32, %arg1: i32) -> (i32, i32, i32) {
    %c0_i32 = arith.constant 0 : i32
    %c0_i32_0 = arith.constant 0 : i32
    %c0_i32_1 = arith.constant 0 : i32
    return %arg0, %c0_i32, %c0_i32_0 : i32, i32, i32
  }
  func.func @transform_1(%arg0: i32, %arg1: i32) -> (i32, i32) {
    %c0_i32 = arith.constant 0 : i32
    %c0_i32_0 = arith.constant 0 : i32
    %c0_i32_1 = arith.constant 0 : i32
    return %c0_i32, %c0_i32_0 : i32, i32
  }
  func.func @transform_2(%arg0: i32, %arg1: i32) -> (i32, i32) {
    %c0_i32 = arith.constant 0 : i32
    %c0_i32_0 = arith.constant 0 : i32
    %c0_i32_1 = arith.constant 0 : i32
    return %c0_i32, %c0_i32_0 : i32, i32
  }
  func.func @transform_3(%arg0: i32, %arg1: i32) -> (i32, i32) {
    %c0_i32 = arith.constant 0 : i32
    %c0_i32_0 = arith.constant 0 : i32
    %c0_i32_1 = arith.constant 0 : i32
    return %c0_i32, %c0_i32_0 : i32, i32
  }
  func.func @transform_4(%arg0: i32, %arg1: i32) -> (i32, i32) {
    %c0_i32 = arith.constant 0 : i32
    %c0_i32_0 = arith.constant 0 : i32
    %c0_i32_1 = arith.constant 0 : i32
    return %c0_i32, %c0_i32_0 : i32, i32
  }
  func.func @transform_5(%arg0: i32, %arg1: i32) -> (i32, i32) {
    %c0_i32 = arith.constant 0 : i32
    %c0_i32_0 = arith.constant 0 : i32
    %c0_i32_1 = arith.constant 0 : i32
    return %c0_i32, %c0_i32_0 : i32, i32
  }
  func.func @transform_6(%arg0: i32, %arg1: i32) -> (i32, i32) {
    %c0_i32 = arith.constant 0 : i32
    %c0_i32_0 = arith.constant 0 : i32
    %c0_i32_1 = arith.constant 0 : i32
    return %c0_i32, %c0_i32_0 : i32, i32
  }
  func.func @transform_7(%arg0: i32, %arg1: i32) -> (i32, i32, i32) {
    %c0_i32 = arith.constant 0 : i32
    %c0_i32_0 = arith.constant 0 : i32
    return %arg0, %arg1, %c0_i32 : i32, i32, i32
  }
}

</mosaic_0001>

<llo_original>
// kernel: tpu_custom_call.1
$region0: #{tpu_custom_call.1}
  #allocation0 [shape = 'u32[]', space=smem, size = 0x4, offset = 0x4, fixed_abs, tag = 'smem constant byte address 0x4 - core index']
  #allocation1 [shape = 'u32[144,128]{1,0:T(1,128)}', space=vmem, size = 0x12000, scoped, tag = 'internal scratch']
  #allocation2 [shape = 'bf16[8,96]{1,0:T(8,128)(2,1)}', space=vmem, size = 0x800, scoped, tag = 'scratch operand']
  #allocation3 [shape = 'bf16[8,32]{1,0:T(8,128)(2,1)}', space=vmem, size = 0x800, scoped, tag = 'scratch operand']
  %s0 = inlined_call_operand.hbm [shape: f32[2,8,32], index: 0, kind: input, shape index: {}]
  %s1 = inlined_call_operand.hbm [shape: f32[1,32], index: 1, kind: input, shape index: {}]
  %s2 = inlined_call_operand.hbm [shape: f32[1,32], index: 2, kind: input, shape index: {}]
  %s3 = inlined_call_operand.hbm [shape: bf16[32,96], index: 3, kind: input, shape index: {}]
  %s4 = inlined_call_operand.hbm [shape: f32[1,96], index: 4, kind: input, shape index: {}]
  %s5 = inlined_call_operand.hbm [shape: bf16[32,32], index: 5, kind: input, shape index: {}]
  %s6 = inlined_call_operand.hbm [shape: f32[1,32], index: 6, kind: input, shape index: {}]
  %s7 = inlined_call_operand.hbm [shape: f32[2,8,32], index: 7, kind: output, shape index: {}]
  %s8 = sld [smem:[#allocation0]]
  $region93: #{tpu_custom_call.1} parent=0
    _
  %s10 = ssub.s32 1, %s8
  %s11 = scalar_select 0, %s10, %s8
  $region1: #{tpu_custom_call.1} parent=0
    #allocation4 [shape = 'u8[8192]{0}', space=vmem, size = 0x2000, scoped, tag = 'input window, operand 0']
    #allocation5 [shape = 's32[2]{0}', space=sflag, size = 0x8, scoped, tag = 'scoped memory for tpu_custom_call.1']
    #allocation6 [shape = 's32[2]{0}', space=sflag, size = 0x8, scoped, tag = 'scoped memory for tpu_custom_call.1']
    #allocation7 [shape = 'u8[512]{0}', space=vmem, size = 0x400, scoped, tag = 'input window, operand 1, single buffered']
    #allocation8 [shape = 's32[1]{0}', space=sflag, size = 0x4, scoped, tag = 'scoped memory for tpu_custom_call.1']
    #allocation9 [shape = 'u8[512]{0}', space=vmem, size = 0x400, scoped, tag = 'input window, operand 2, single buffered']
    #allocation10 [shape = 'u8[8192]{0}', space=vmem, size = 0x2000, scoped, tag = 'input window, operand 3, single buffered']
    #allocation11 [shape = 's32[1]{0}', space=sflag, size = 0x4, scoped, tag = 'scoped memory for tpu_custom_call.1']
    #allocation12 [shape = 'u8[512]{0}', space=vmem, size = 0x400, scoped, tag = 'input window, operand 4, single buffered']
    #allocation13 [shape = 'u8[8192]{0}', space=vmem, size = 0x2000, scoped, tag = 'input window, operand 5, single buffered']
    #allocation14 [shape = 's32[1]{0}', space=sflag, size = 0x4, scoped, tag = 'scoped memory for tpu_custom_call.1']
    #allocation15 [shape = 'u8[512]{0}', space=vmem, size = 0x400, scoped, tag = 'input window, operand 6, single buffered']
    #allocation16 [shape = 'u8[8192]{0}', space=vmem, size = 0x2000, scoped, tag = 'output window, operand 0']
    %12 = vsyncpa [#allocation5], 0
    %s13 = scalar_lea.sflag [#allocation5], 1
    %14 = vsyncpa %s13, 0
    %15 = vsyncpa [#allocation8], 0
    %16 = vsyncpa [#allocation11], 0
    %17 = vsyncpa [#allocation14], 0
    %18 = vsyncpa [#allocation6], 0
    %s19 = scalar_lea.sflag [#allocation6], 1
    %20 = vsyncpa %s19, 0
    loop: start=0, step=1, limit=4
    $region2: #{tpu_custom_call.1} parent=1 // loop_pre_header
      _
    $region3: #{tpu_custom_call.1} parent=1 // loop_header
      %s22 = sphi 0, %s26
      %p23 = scmp.ge.s32.totalorder %s22, 4
      %s29 = sphi 0, %s41
      %s30 = sphi 0, %s37
      %s31 = sphi 0, %s29
      %s32 = sphi 0, %s30
      %s33 = sphi 0, %s31
      %s34 = sphi 0, %s32
      %s44 = sphi 0, %s46
      %s47 = sphi 0, %s44
      %s48 = sphi 0, %s47
      %s64 = sphi 0, %s48
      %s68 = sphi 0, %s68
      %s70 = sphi 0, %s68
      %s71 = sphi 0, %s70
      %s85 = sphi 0, %s71
      %s89 = sphi 0, %s89
      %s91 = sphi 0, %s89
      %s92 = sphi 0, %s91
      %s106 = sphi 0, %s92
      %s110 = sphi 0, %s110
      %s112 = sphi 0, %s110
      %s113 = sphi 0, %s112
      %s127 = sphi 0, %s113
      %s131 = sphi 0, %s131
      %s133 = sphi 0, %s131
      %s134 = sphi 0, %s133
      %s148 = sphi 0, %s134
      %s152 = sphi 0, %s152
      %s154 = sphi 0, %s152
      %s155 = sphi 0, %s154
      %s169 = sphi 0, %s155
      %s173 = sphi 0, %s173
      %s175 = sphi 0, %s173
      %s176 = sphi 0, %s175
      %s190 = sphi 0, %s176
      %s198 = sphi 0, %s200
      %s201 = sphi 0, %s198
      %s202 = sphi 0, %s201
      %s218 = sphi 0, %s202
    $region4: #{tpu_custom_call.1} parent=1 // loop_header_branch
      %25 = sbr.rel (%p23) target = $region8
    $region5: #{tpu_custom_call.1} parent=1 // loop_body
      %s27 = ssub.s32 %s22, 1
      %s28 = ssub.s32 %s22, 2
      %s35 = sadd.s32 1, %s30
      %p36 = scmp.ge.s32.totalorder %s35, 1
      %s37 = scalar_select %p36, 0, %s35
      %s38 = sadd.s32 1, %s29
      %s39 = scalar_select %p36, %s38, %s29
      %p40 = scmp.ge.s32.totalorder %s39, 2
      %s41 = scalar_select %p40, 0, %s39
      %s42 = ssub.s32 %s29, %s41
      %p43 = scmp.eq.s32.totalorder %s42, 0
      %s45 = sadd.s32 %s44, 1
      %s46 = scalar_select %p43, %s44, %s45
      %p49 = pneg %p43
      %p50 = scmp.eq.s32.totalorder %s22, 1
      %p51 = por %p49, %p50
      %p52 = scmp.ne.s32.totalorder %s44, %s47
      %p53 = scmp.eq.s32.totalorder %s22, 0
      %p54 = por %p52, %p53
      %p55 = scmp.ne.s32.totalorder %s44, %s47
      %p56 = scmp.eq.s32.totalorder %s27, 1
      %p57 = por %p55, %p56
      %p58 = scmp.ne.s32.totalorder %s47, %s48
      %p59 = scmp.eq.s32.totalorder %s27, 0
      %p60 = por %p58, %p59
      %p61 = scmp.ne.s32.totalorder %s47, %s48
      %p62 = scmp.eq.s32.totalorder %s28, 1
      %p63 = por %p61, %p62
      %p65 = scmp.ne.s32.totalorder %s48, %s64
      %p66 = scmp.eq.s32.totalorder %s28, 0
      %p67 = por %p65, %p66
      %s69 = sadd.s32 %s68, 1
      %p72 = scmp.eq.s32.totalorder %s22, 1
      %p73 = scmp.ne.s32.totalorder %s68, %s70
      %p74 = scmp.eq.s32.totalorder %s22, 0
      %p75 = por %p73, %p74
      %p76 = scmp.ne.s32.totalorder %s68, %s70
      %p77 = scmp.eq.s32.totalorder %s27, 1
      %p78 = por %p76, %p77
      %p79 = scmp.ne.s32.totalorder %s70, %s71
      %p80 = scmp.eq.s32.totalorder %s27, 0
      %p81 = por %p79, %p80
      %p82 = scmp.ne.s32.totalorder %s70, %s71
      %p83 = scmp.eq.s32.totalorder %s28, 1
      %p84 = por %p82, %p83
      %p86 = scmp.ne.s32.totalorder %s71, %s85
      %p87 = scmp.eq.s32.totalorder %s28, 0
      %p88 = por %p86, %p87
      %s90 = sadd.s32 %s89, 1
      %p93 = scmp.eq.s32.totalorder %s22, 1
      %p94 = scmp.ne.s32.totalorder %s89, %s91
      %p95 = scmp.eq.s32.totalorder %s22, 0
      %p96 = por %p94, %p95
      %p97 = scmp.ne.s32.totalorder %s89, %s91
      %p98 = scmp.eq.s32.totalorder %s27, 1
      %p99 = por %p97, %p98
      %p100 = scmp.ne.s32.totalorder %s91, %s92
      %p101 = scmp.eq.s32.totalorder %s27, 0
      %p102 = por %p100, %p101
      %p103 = scmp.ne.s32.totalorder %s91, %s92
      %p104 = scmp.eq.s32.totalorder %s28, 1
      %p105 = por %p103, %p104
      %p107 = scmp.ne.s32.totalorder %s92, %s106
      %p108 = scmp.eq.s32.totalorder %s28, 0
      %p109 = por %p107, %p108
      %s111 = sadd.s32 %s110, 1
      %p114 = scmp.eq.s32.totalorder %s22, 1
      %p115 = scmp.ne.s32.totalorder %s110, %s112
      %p116 = scmp.eq.s32.totalorder %s22, 0
      %p117 = por %p115, %p116
      %p118 = scmp.ne.s32.totalorder %s110, %s112
      %p119 = scmp.eq.s32.totalorder %s27, 1
      %p120 = por %p118, %p119
      %p121 = scmp.ne.s32.totalorder %s112, %s113
      %p122 = scmp.eq.s32.totalorder %s27, 0
      %p123 = por %p121, %p122
      %p124 = scmp.ne.s32.totalorder %s112, %s113
      %p125 = scmp.eq.s32.totalorder %s28, 1
      %p126 = por %p124, %p125
      %p128 = scmp.ne.s32.totalorder %s113, %s127
      %p129 = scmp.eq.s32.totalorder %s28, 0
      %p130 = por %p128, %p129
      %s132 = sadd.s32 %s131, 1
      %p135 = scmp.eq.s32.totalorder %s22, 1
      %p136 = scmp.ne.s32.totalorder %s131, %s133
      %p137 = scmp.eq.s32.totalorder %s22, 0
      %p138 = por %p136, %p137
      %p139 = scmp.ne.s32.totalorder %s131, %s133
      %p140 = scmp.eq.s32.totalorder %s27, 1
      %p141 = por %p139, %p140
      %p142 = scmp.ne.s32.totalorder %s133, %s134
      %p143 = scmp.eq.s32.totalorder %s27, 0
      %p144 = por %p142, %p143
      %p145 = scmp.ne.s32.totalorder %s133, %s134
      %p146 = scmp.eq.s32.totalorder %s28, 1
      %p147 = por %p145, %p146
      %p149 = scmp.ne.s32.totalorder %s134, %s148
      %p150 = scmp.eq.s32.totalorder %s28, 0
      %p151 = por %p149, %p150
      %s153 = sadd.s32 %s152, 1
      %p156 = scmp.eq.s32.totalorder %s22, 1
      %p157 = scmp.ne.s32.totalorder %s152, %s154
      %p158 = scmp.eq.s32.totalorder %s22, 0
      %p159 = por %p157, %p158
      %p160 = scmp.ne.s32.totalorder %s152, %s154
      %p161 = scmp.eq.s32.totalorder %s27, 1
      %p162 = por %p160, %p161
      %p163 = scmp.ne.s32.totalorder %s154, %s155
      %p164 = scmp.eq.s32.totalorder %s27, 0
      %p165 = por %p163, %p164
      %p166 = scmp.ne.s32.totalorder %s154, %s155
      %p167 = scmp.eq.s32.totalorder %s28, 1
      %p168 = por %p166, %p167
      %p170 = scmp.ne.s32.totalorder %s155, %s169
      %p171 = scmp.eq.s32.totalorder %s28, 0
      %p172 = por %p170, %p171
      %s174 = sadd.s32 %s173, 1
      %p177 = scmp.eq.s32.totalorder %s22, 1
      %p178 = scmp.ne.s32.totalorder %s173, %s175
      %p179 = scmp.eq.s32.totalorder %s22, 0
      %p180 = por %p178, %p179
      %p181 = scmp.ne.s32.totalorder %s173, %s175
      %p182 = scmp.eq.s32.totalorder %s27, 1
      %p183 = por %p181, %p182
      %p184 = scmp.ne.s32.totalorder %s175, %s176
      %p185 = scmp.eq.s32.totalorder %s27, 0
      %p186 = por %p184, %p185
      %p187 = scmp.ne.s32.totalorder %s175, %s176
      %p188 = scmp.eq.s32.totalorder %s28, 1
      %p189 = por %p187, %p188
      %p191 = scmp.ne.s32.totalorder %s176, %s190
      %p192 = scmp.eq.s32.totalorder %s28, 0
      %p193 = por %p191, %p192
      %s194 = ssub.s32 %s29, %s41
      %s195 = ssub.s32 %s30, %s37
      %s196 = sor.u32 %s194, %s195
      %p197 = scmp.eq.s32.totalorder %s196, 0
      %s199 = sadd.s32 %s198, 1
      %s200 = scalar_select %p197, %s198, %s199
      %p203 = pneg %p197
      %p204 = scmp.eq.s32.totalorder %s22, 1
      %p205 = por %p203, %p204
      %p206 = scmp.ne.s32.totalorder %s198, %s201
      %p207 = scmp.eq.s32.totalorder %s22, 0
      %p208 = por %p206, %p207
      %p209 = scmp.ne.s32.totalorder %s198, %s201
      %p210 = scmp.eq.s32.totalorder %s27, 1
      %p211 = por %p209, %p210
      %p212 = scmp.ne.s32.totalorder %s201, %s202
      %p213 = scmp.eq.s32.totalorder %s27, 0
      %p214 = por %p212, %p213
      %p215 = scmp.ne.s32.totalorder %s201, %s202
      %p216 = scmp.eq.s32.totalorder %s28, 1
      %p217 = por %p215, %p216
      %p219 = scmp.ne.s32.totalorder %s202, %s218
      %p220 = scmp.eq.s32.totalorder %s28, 0
      %p221 = por %p219, %p220
      %p222 = scmp.le.s32.totalorder 1, %s22
      %p223 = scmp.lt.s32.totalorder %s22, 3
      %p224 = pnand %p222, %p223
      %p225 = pneg %p224
      // Predicated region
      $region9: #{tpu_custom_call.1} parent=5 // pred_check
        _
      $region10: #{tpu_custom_call.1} parent=5 // pred_check_branch
        %227 = sbr.rel (%p224) target = $region12
      $region11: #{tpu_custom_call.1} parent=5 // pred_region
        %s228 = ssub.s32 %s22, 1
        // Predicated region
        $region13: #{tpu_custom_call.1} parent=11 // pred_check
          %p229 = pneg %p81
        $region14: #{tpu_custom_call.1} parent=11 // pred_check_branch
          %231 = sbr.rel (%p229) target = $region16
        $region15: #{tpu_custom_call.1} parent=11 // pred_region
          %s233 = ssub.s32 16, 16
          %234 = vsyncadd [#allocation8], %s233
          %s236 = sshll.u32 [#allocation7], 4
          %s237 = int_to_ptr.vmem [resolvable:$true] %s236
          %239 = dma.hbm_to_vmem [thread:$0]  %s1, 16, %s237, [#allocation8]
        $region16: #{tpu_custom_call.1} parent=11 // pred_fallthru
          _
        // Predicated region
        $region17: #{tpu_custom_call.1} parent=11 // pred_check
          %p240 = pneg %p102
        $region18: #{tpu_custom_call.1} parent=11 // pred_check_branch
          %242 = sbr.rel (%p240) target = $region20
        $region19: #{tpu_custom_call.1} parent=11 // pred_region
          %s244 = ssub.s32 16, 16
          %245 = vsyncadd [#allocation8], %s244
          %s247 = sshll.u32 [#allocation9], 4
          %s248 = int_to_ptr.vmem [resolvable:$true] %s247
          %250 = dma.hbm_to_vmem [thread:$0]  %s2, 16, %s248, [#allocation8]
        $region20: #{tpu_custom_call.1} parent=11 // pred_fallthru
          _
        // Predicated region
        $region21: #{tpu_custom_call.1} parent=11 // pred_check
          %p251 = pneg %p123
        $region22: #{tpu_custom_call.1} parent=11 // pred_check_branch
          %253 = sbr.rel (%p251) target = $region24
        $region23: #{tpu_custom_call.1} parent=11 // pred_region
          %s255 = ssub.s32 256, 256
          %256 = vsyncadd [#allocation11], %s255
          %s257 = sshll.u32 [#allocation10], 4
          %s258 = int_to_ptr.vmem [resolvable:$true] %s257
          %263 = dma.hbm_to_vmem [thread:$0]  %s3, 256, %s258, [#allocation11], 64, 64, 4
        $region24: #{tpu_custom_call.1} parent=11 // pred_fallthru
          _
        // Predicated region
        $region25: #{tpu_custom_call.1} parent=11 // pred_check
          %p264 = pneg %p144
        $region26: #{tpu_custom_call.1} parent=11 // pred_check_branch
          %266 = sbr.rel (%p264) target = $region28
        $region27: #{tpu_custom_call.1} parent=11 // pred_region
          %s268 = ssub.s32 16, 16
          %269 = vsyncadd [#allocation11], %s268
          %s271 = sshll.u32 [#allocation12], 4
          %s272 = int_to_ptr.vmem [resolvable:$true] %s271
          %274 = dma.hbm_to_vmem [thread:$0]  %s4, 16, %s272, [#allocation11]
        $region28: #{tpu_custom_call.1} parent=11 // pred_fallthru
          _
        // Predicated region
        $region29: #{tpu_custom_call.1} parent=11 // pred_check
          %p275 = pneg %p165
        $region30: #{tpu_custom_call.1} parent=11 // pred_check_branch
          %277 = sbr.rel (%p275) target = $region32
        $region31: #{tpu_custom_call.1} parent=11 // pred_region
          %s279 = ssub.s32 256, 256
          %280 = vsyncadd [#allocation14], %s279
          %s281 = sshll.u32 [#allocation13], 4
          %s282 = int_to_ptr.vmem [resolvable:$true] %s281
          %287 = dma.hbm_to_vmem [thread:$0]  %s5, 256, %s282, [#allocation14], 64, 64, 4
        $region32: #{tpu_custom_call.1} parent=11 // pred_fallthru
          _
        // Predicated region
        $region33: #{tpu_custom_call.1} parent=11 // pred_check
          %p288 = pneg %p186
        $region34: #{tpu_custom_call.1} parent=11 // pred_check_branch
          %290 = sbr.rel (%p288) target = $region36
        $region35: #{tpu_custom_call.1} parent=11 // pred_region
          %s292 = ssub.s32 16, 16
          %293 = vsyncadd [#allocation14], %s292
          %s295 = sshll.u32 [#allocation15], 4
          %s296 = int_to_ptr.vmem [resolvable:$true] %s295
          %298 = dma.hbm_to_vmem [thread:$0]  %s6, 16, %s296, [#allocation14]
        $region36: #{tpu_custom_call.1} parent=11 // pred_fallthru
          _
      $region12: #{tpu_custom_call.1} parent=5 // pred_fallthru
        _
      %p299 = scmp.lt.s32.totalorder %s22, 2
      // Predicated region
      $region37: #{tpu_custom_call.1} parent=5 // pred_check
        %p300 = pneg %p299
      $region38: #{tpu_custom_call.1} parent=5 // pred_check_branch
        %302 = sbr.rel (%p300) target = $region40
      $region39: #{tpu_custom_call.1} parent=5 // pred_region
        // Predicated region
        $region41: #{tpu_custom_call.1} parent=39 // pred_check
          %p303 = pneg %p54
        $region42: #{tpu_custom_call.1} parent=39 // pred_check_branch
          %305 = sbr.rel (%p303) target = $region44
        $region43: #{tpu_custom_call.1} parent=39 // pred_region
          %s306 = sand.u32 %s44, 1
          %s307 = scalar_lea.sflag [#allocation5], %s306
          %s308 = sand.u32 %s44, 1
          %s309 = smul.addr %s308, 8
          %s310 = scalar_lea.vmem [#allocation4], %s309
          %s312 = ssub.s32 128, 128
          %313 = vsyncadd %s307, %s312
          %s314 = smul.addr %s29, 128
          %s315 = scalar_lea.hbm %s0, %s314
          %s317 = sshll.u32 %s310, 4
          %s318 = int_to_ptr.vmem [resolvable:$true] %s317
          %320 = dma.hbm_to_vmem [thread:$0]  %s315, 128, %s318, %s307
        $region44: #{tpu_custom_call.1} parent=39 // pred_fallthru
          _
      $region40: #{tpu_custom_call.1} parent=5 // pred_fallthru
        _
      %p321 = scmp.le.s32.totalorder 1, %s22
      %p322 = scmp.lt.s32.totalorder %s22, 3
      %p323 = pnand %p321, %p322
      %p324 = pneg %p323
      // Predicated region
      $region45: #{tpu_custom_call.1} parent=5 // pred_check
        _
      $region46: #{tpu_custom_call.1} parent=5 // pred_check_branch
        %326 = sbr.rel (%p323) target = $region48
      $region47: #{tpu_custom_call.1} parent=5 // pred_region
        %s327 = ssub.s32 %s22, 1
        %s328 = sand.u32 %s47, 1
        %s329 = scalar_lea.sflag [#allocation5], %s328
        %s330 = sand.u32 %s47, 1
        %s331 = smul.addr %s330, 8
        %s332 = scalar_lea.vmem [#allocation4], %s331
        // Predicated region
        $region49: #{tpu_custom_call.1} parent=47 // pred_check
          %p333 = pneg %p60
        $region50: #{tpu_custom_call.1} parent=47 // pred_check_branch
          %335 = sbr.rel (%p333) target = $region52
        $region51: #{tpu_custom_call.1} parent=47 // pred_region
          %336 = dma.done %s329, 128
        $region52: #{tpu_custom_call.1} parent=47 // pred_fallthru
          _
        // Predicated region
        $region53: #{tpu_custom_call.1} parent=47 // pred_check
          %p337 = pneg %p81
        $region54: #{tpu_custom_call.1} parent=47 // pred_check_branch
          %339 = sbr.rel (%p337) target = $region56
        $region55: #{tpu_custom_call.1} parent=47 // pred_region
          %340 = dma.done [#allocation8], 16
        $region56: #{tpu_custom_call.1} parent=47 // pred_fallthru
          _
        // Predicated region
        $region57: #{tpu_custom_call.1} parent=47 // pred_check
          %p341 = pneg %p102
        $region58: #{tpu_custom_call.1} parent=47 // pred_check_branch
          %343 = sbr.rel (%p341) target = $region60
        $region59: #{tpu_custom_call.1} parent=47 // pred_region
          %344 = dma.done [#allocation8], 16
        $region60: #{tpu_custom_call.1} parent=47 // pred_fallthru
          _
        // Predicated region
        $region61: #{tpu_custom_call.1} parent=47 // pred_check
          %p345 = pneg %p123
        $region62: #{tpu_custom_call.1} parent=47 // pred_check_branch
          %347 = sbr.rel (%p345) target = $region64
        $region63: #{tpu_custom_call.1} parent=47 // pred_region
          %348 = dma.done [#allocation11], 256
        $region64: #{tpu_custom_call.1} parent=47 // pred_fallthru
          _
        // Predicated region
        $region65: #{tpu_custom_call.1} parent=47 // pred_check
          %p349 = pneg %p144
        $region66: #{tpu_custom_call.1} parent=47 // pred_check_branch
          %351 = sbr.rel (%p349) target = $region68
        $region67: #{tpu_custom_call.1} parent=47 // pred_region
          %352 = dma.done [#allocation11], 16
        $region68: #{tpu_custom_call.1} parent=47 // pred_fallthru
          _
        // Predicated region
        $region69: #{tpu_custom_call.1} parent=47 // pred_check
          %p353 = pneg %p165
        $region70: #{tpu_custom_call.1} parent=47 // pred_check_branch
          %355 = sbr.rel (%p353) target = $region72
        $region71: #{tpu_custom_call.1} parent=47 // pred_region
          %356 = dma.done [#allocation14], 256
        $region72: #{tpu_custom_call.1} parent=47 // pred_fallthru
          _
        // Predicated region
        $region73: #{tpu_custom_call.1} parent=47 // pred_check
          %p357 = pneg %p186
        $region74: #{tpu_custom_call.1} parent=47 // pred_check_branch
          %359 = sbr.rel (%p357) target = $region76
        $region75: #{tpu_custom_call.1} parent=47 // pred_region
          %360 = dma.done [#allocation14], 16
        $region76: #{tpu_custom_call.1} parent=47 // pred_fallthru
          _
        %s361 = sand.u32 %s47, 1
        %s362 = scalar_lea.sflag [#allocation5], %s361
        %s363 = sand.u32 %s47, 1
        %s364 = smul.addr %s363, 8
        %s365 = scalar_lea.vmem [#allocation4], %s364
        %p366 = pneg %p60
        %p367 = pneg %p57
        %p368 = pneg %p81
        %p369 = pneg %p78
        %p370 = pneg %p102
        %p371 = pneg %p99
        %p372 = pneg %p123
        %p373 = pneg %p120
        %p374 = pneg %p144
        %p375 = pneg %p141
        %p376 = pneg %p165
        %p377 = pneg %p162
        %p378 = pneg %p186
        %p379 = pneg %p183
        %p380 = pneg %p214
        %p381 = pneg %p211
        %s382 = sand.u32 %s201, 1
        %s383 = scalar_lea.sflag [#allocation6], %s382
        %s384 = sand.u32 %s201, 1
        %s385 = smul.addr %s384, 8
        %s386 = scalar_lea.vmem [#allocation16], %s385
        %p388 = scmp.eq.s32.totalorder %s32, 0
        // Predicated region
        $region77: #{tpu_custom_call.1} parent=47 // pred_check
          %p389 = pneg %p388
        $region78: #{tpu_custom_call.1} parent=47 // pred_check_branch
          %391 = sbr.rel (%p389) target = $region80
        $region79: #{tpu_custom_call.1} parent=47 // pred_region
          %v392 = vld [vmem:[%s332] sm:$0xff]
          %vm393 = vcmask 261120
          %v394 = vsel %vm393, %v392, 0.0
          %395 = vadd.xlane.f32.xlu0 %v394
          %v396 = vpop.xlane.xlu0 %395
          %v397 = vrcp.pop 32.0
          %v398 = vmul.f32 %v396, %v397
          %v399 = vsub.f32 %v392, %v398
          %v400 = vmul.f32 %v399, %v399
          %v401 = vsel %vm393, %v400, 0.0
          %402 = vadd.xlane.f32.xlu0 %v401
          %v403 = vpop.xlane.xlu0 %402
          %v404 = vmul.f32 %v403, %v397
          %v405 = vadd.f32 %v404, 1e-05
          %v406 = vrsqrt.pop %v405
          %v407 = vmul.f32 %v399, %v406
          %v408 = vld [vmem:[#allocation7] sm:$0x1]
          %v410 = vlaneseq
          %v411 = vshrl.u32 %v410, 7
          %v412 = vsub.s32 0, %v411
          %v413 = vrot.slane %v408, %v412
          %v415 = vmul.f32 %v407, %v413
          %v416 = vld [vmem:[#allocation9] sm:$0x1]
          %v418 = vlaneseq
          %v419 = vshrl.u32 %v418, 7
          %v420 = vsub.s32 0, %v419
          %v421 = vrot.slane %v416, %v420
          %v423 = vadd.f32 %v415, %v421
          %v424 = vpack.c.bf16 %v423, %v423
          %v425 = vld [vmem:[#allocation10] sm:$0xf]
          %v426 = vld [vmem:[#allocation10 + $0x4] sm:$0xf]
          %v427 = vld [vmem:[#allocation10 + $0x8] sm:$0xf]
          %v428 = vld [vmem:[#allocation10 + $0xc] sm:$0xf]
          %v429 = vld [vmem:[#allocation12] sm:$0x1]
          %v431 = vlaneseq
          %v432 = vshrl.u32 %v431, 7
          %v433 = vsub.s32 0, %v432
          %v434 = vrot.slane %v429, %v433
          %v440 = vunpack.c.l.b16 %v425
          %v441 = vunpack.c.l.b16 %v426
          %v442 = vunpack.c.l.b16 %v427
          %v443 = vunpack.c.l.b16 %v428
          %v444 = vpack.c.b16 %v441, %v440
          %v445 = vpack.c.b16 %v443, %v442
          %v449 = vsel %vm393, %v424, 0
          %451 = vmatprep.subr.bf16.mxu0 0
          %452 = vmatpush1.bf16.msra.mxu0 %v444
          %453 = vmatprep.subr.bf16.mxu0 0
          %454 = vmatpush1.bf16.msra.mxu0 %v445
          %455 = vmatprep.subr.bf16.mxu0 0
          %456 = vmatpush1.bf16.msra.mxu0 0
          %457 = vmatprep.subr.bf16.mxu0 0
          %458 = vmatpush1.bf16.msra.mxu0 0
          %459 = vmatprep.subr.bf16.mxu0 0
          %460 = vmatpush1.bf16.msra.mxu0 0
          %461 = vmatprep.subr.bf16.mxu0 0
          %462 = vmatpush1.bf16.msra.mxu0 0
          %463 = vmatprep.subr.bf16.mxu0 0
          %464 = vmatpush1.bf16.msra.mxu0 0
          %465 = vmatprep.subr.bf16.mxu0 0
          %466 = vmatpush1.bf16.msra.mxu0 0
          %467 = vmatprep.subr.bf16.mxu0 0
          %468 = vmatpush1.bf16.msra.mxu0 0
          %469 = vmatprep.subr.bf16.mxu0 0
          %470 = vmatpush1.bf16.msra.mxu0 0
          %471 = vmatprep.subr.bf16.mxu0 0
          %472 = vmatpush1.bf16.msra.mxu0 0
          %473 = vmatprep.subr.bf16.mxu0 0
          %474 = vmatpush1.bf16.msra.mxu0 0
          %475 = vmatprep.subr.bf16.mxu0 0
          %476 = vmatpush1.bf16.msra.mxu0 0
          %477 = vmatprep.subr.bf16.mxu0 0
          %478 = vmatpush1.bf16.msra.mxu0 0
          %479 = vmatprep.subr.bf16.mxu0 0
          %480 = vmatpush1.bf16.msra.mxu0 0
          %481 = vmatprep.subr.bf16.mxu0 0
          %482 = vmatpush1.bf16.msra.mxu0 0
          %483 = vmatprep.mubr.bf16.mxu0 0
          %484 = vmatmul.mubr.bf16.gmra.mrb[0].mxu0 %v449
          %v485 = vpop.f32.mrb[0].mxu0
          %v486 = vadd.f32 %v434, %v485
          %v487 = vpop.f32.mrb[0].mxu0
          %v488 = vpop.f32.mrb[0].mxu0
          %v489 = vpop.f32.mrb[0].mxu0
          %490 = vdwg.mxu0
          %v491 = vpack.c.bf16 %v486, %v486
          %vm492 = vcmask 781312
          %493 = vst.msk [vmem:[#allocation2] sm:$0xf] %vm492, %v491
        $region80: #{tpu_custom_call.1} parent=47 // pred_fallthru
          _
        %s494 = smul.u32 %s32, 8
        %s495 = sshra.s32 %s494, 3
        %s496 = sand.u32 %s494, 7
        %s497 = smul.addr %s495, 4
        %s498 = scalar_lea.vmem [#allocation2], %s497
        %v499 = vld [vmem:[%s498] sm:$0xf]
        %v500 = vld [vmem:[#allocation2] sm:$0xf]
        %v502 = vunpack.c.l.b16 %v500
        %v503 = vpack.c.b16 %v502, %v502
        %504 = vrot.lane.b32.xlu0 %v503, 96
        %v505 = vpop.permute.xlu0 %504
        %vm506 = vcmask 64512
        %v508 = vsel %vm506, %v499, 0
        %v511 = vsel %vm506, %v505, 0
        %513 = vmatprep.subr.bf16.mxu0 0
        %514 = vmatpush1.bf16.xpose.msra.mxu0 %v511
        %515 = vmatprep.subr.bf16.mxu0 0
        %516 = vmatpush1.bf16.xpose.msra.mxu0 0
        %517 = vmatprep.subr.bf16.mxu0 0
        %518 = vmatpush1.bf16.xpose.msra.mxu0 0
        %519 = vmatprep.subr.bf16.mxu0 0
        %520 = vmatpush1.bf16.xpose.msra.mxu0 0
        %521 = vmatprep.subr.bf16.mxu0 0
        %522 = vmatpush1.bf16.xpose.msra.mxu0 0
        %523 = vmatprep.subr.bf16.mxu0 0
        %524 = vmatpush1.bf16.xpose.msra.mxu0 0
        %525 = vmatprep.subr.bf16.mxu0 0
        %526 = vmatpush1.bf16.xpose.msra.mxu0 0
        %527 = vmatprep.subr.bf16.mxu0 0
        %528 = vmatpush1.bf16.xpose.msra.mxu0 0
        %529 = vmatprep.subr.bf16.mxu0 0
        %530 = vmatpush1.bf16.xpose.msra.mxu0 0
        %531 = vmatprep.subr.bf16.mxu0 0
        %532 = vmatpush1.bf16.xpose.msra.mxu0 0
        %533 = vmatprep.subr.bf16.mxu0 0
        %534 = vmatpush1.bf16.xpose.msra.mxu0 0
        %535 = vmatprep.subr.bf16.mxu0 0
        %536 = vmatpush1.bf16.xpose.msra.mxu0 0
        %537 = vmatprep.subr.bf16.mxu0 0
        %538 = vmatpush1.bf16.xpose.msra.mxu0 0
        %539 = vmatprep.subr.bf16.mxu0 0
        %540 = vmatpush1.bf16.xpose.msra.mxu0 0
        %541 = vmatprep.subr.bf16.mxu0 0
        %542 = vmatpush1.bf16.xpose.msra.mxu0 0
        %543 = vmatprep.subr.bf16.mxu0 0
        %544 = vmatpush1.bf16.xpose.msra.mxu0 0
        %545 = vmatprep.mubr.bf16.mxu0 0
        %546 = vmatmul.mubr.bf16.gmra.mrb[0].mxu0 %v508
        %v547 = vpop.f32.mrb[0].mxu0
        %v548 = vadd.f32 0.0, %v547
        %v549 = vpop.f32.mrb[0].mxu0
        %v550 = vpop.f32.mrb[0].mxu0
        %v551 = vpop.f32.mrb[0].mxu0
        %552 = vdwg.mxu0
        %v553 = vsel %vm506, %v548, -inf
        %554 = vmax.xlane.f32.xlu0 %v553
        %v555 = vpop.xlane.xlu0 %554
        %v556 = vsub.f32 %v548, %v555
        %v557 = vmul.f32 %v556, 1.442695
        %v558 = vpow.pop %v557
        %v559 = vsel %vm506, %v558, 0.0
        %560 = vadd.xlane.f32.xlu0 %v559
        %v561 = vpop.xlane.xlu0 %560
        %v562 = vpack.c.bf16 %v558, %v558
        %563 = vrot.lane.b32.xlu0 %v503, 64
        %v564 = vpop.permute.xlu0 %563
        %v566 = vsel %vm506, %v562, 0
        %vm568 = vcmask 1043456
        %v570 = vsel %vm568, %v564, 0
        %572 = vmatprep.subr.bf16.mxu0 0
        %573 = vmatpush1.bf16.msra.mxu0 %v570
        %574 = vmatprep.subr.bf16.mxu0 0
        %575 = vmatpush1.bf16.msra.mxu0 0
        %576 = vmatprep.subr.bf16.mxu0 0
        %577 = vmatpush1.bf16.msra.mxu0 0
        %578 = vmatprep.subr.bf16.mxu0 0
        %579 = vmatpush1.bf16.msra.mxu0 0
        %580 = vmatprep.subr.bf16.mxu0 0
        %581 = vmatpush1.bf16.msra.mxu0 0
        %582 = vmatprep.subr.bf16.mxu0 0
        %583 = vmatpush1.bf16.msra.mxu0 0
        %584 = vmatprep.subr.bf16.mxu0 0
        %585 = vmatpush1.bf16.msra.mxu0 0
        %586 = vmatprep.subr.bf16.mxu0 0
        %587 = vmatpush1.bf16.msra.mxu0 0
        %588 = vmatprep.subr.bf16.mxu0 0
        %589 = vmatpush1.bf16.msra.mxu0 0
        %590 = vmatprep.subr.bf16.mxu0 0
        %591 = vmatpush1.bf16.msra.mxu0 0
        %592 = vmatprep.subr.bf16.mxu0 0
        %593 = vmatpush1.bf16.msra.mxu0 0
        %594 = vmatprep.subr.bf16.mxu0 0
        %595 = vmatpush1.bf16.msra.mxu0 0
        %596 = vmatprep.subr.bf16.mxu0 0
        %597 = vmatpush1.bf16.msra.mxu0 0
        %598 = vmatprep.subr.bf16.mxu0 0
        %599 = vmatpush1.bf16.msra.mxu0 0
        %600 = vmatprep.subr.bf16.mxu0 0
        %601 = vmatpush1.bf16.msra.mxu0 0
        %602 = vmatprep.subr.bf16.mxu0 0
        %603 = vmatpush1.bf16.msra.mxu0 0
        %604 = vmatprep.mubr.bf16.mxu0 0
        %605 = vmatmul.mubr.bf16.gmra.mrb[0].mxu0 %v566
        %v606 = vpop.f32.mrb[0].mxu0
        %v607 = vadd.f32 0.0, %v606
        %v608 = vpop.f32.mrb[0].mxu0
        %v609 = vpop.f32.mrb[0].mxu0
        %v610 = vpop.f32.mrb[0].mxu0
        %611 = vdwg.mxu0
        %v612 = vrcp.pop %v561
        %v613 = vmul.f32 %v607, %v612
        %v614 = vpack.c.bf16 %v613, %v613
        %vm615 = vcmask 60416
        %616 = vst.msk [vmem:[#allocation3] sm:$0xf] %vm615, %v614
        %v617 = vld [vmem:[%s498] sm:$0xf]
        %v618 = vld [vmem:[#allocation2] sm:$0xf]
        %v620 = vunpack.c.l.b16 %v617
        %v621 = vpack.c.b16 %v620, %v620
        %622 = vrot.lane.b32.xlu0 %v621, 120
        %v623 = vpop.permute.xlu0 %622
        %v625 = vunpack.c.l.b16 %v618
        %v626 = vpack.c.b16 %v625, %v625
        %627 = vrot.lane.b32.xlu0 %v626, 88
        %v628 = vpop.permute.xlu0 %627
        %v630 = vsel %vm506, %v623, 0
        %v633 = vsel %vm506, %v628, 0
        %635 = vmatprep.subr.bf16.mxu0 0
        %636 = vmatpush1.bf16.xpose.msra.mxu0 %v633
        %637 = vmatprep.subr.bf16.mxu0 0
        %638 = vmatpush1.bf16.xpose.msra.mxu0 0
        %639 = vmatprep.subr.bf16.mxu0 0
        %640 = vmatpush1.bf16.xpose.msra.mxu0 0
        %641 = vmatprep.subr.bf16.mxu0 0
        %642 = vmatpush1.bf16.xpose.msra.mxu0 0
        %643 = vmatprep.subr.bf16.mxu0 0
        %644 = vmatpush1.bf16.xpose.msra.mxu0 0
        %645 = vmatprep.subr.bf16.mxu0 0
        %646 = vmatpush1.bf16.xpose.msra.mxu0 0
        %647 = vmatprep.subr.bf16.mxu0 0
        %648 = vmatpush1.bf16.xpose.msra.mxu0 0
        %649 = vmatprep.subr.bf16.mxu0 0
        %650 = vmatpush1.bf16.xpose.msra.mxu0 0
        %651 = vmatprep.subr.bf16.mxu0 0
        %652 = vmatpush1.bf16.xpose.msra.mxu0 0
        %653 = vmatprep.subr.bf16.mxu0 0
        %654 = vmatpush1.bf16.xpose.msra.mxu0 0
        %655 = vmatprep.subr.bf16.mxu0 0
        %656 = vmatpush1.bf16.xpose.msra.mxu0 0
        %657 = vmatprep.subr.bf16.mxu0 0
        %658 = vmatpush1.bf16.xpose.msra.mxu0 0
        %659 = vmatprep.subr.bf16.mxu0 0
        %660 = vmatpush1.bf16.xpose.msra.mxu0 0
        %661 = vmatprep.subr.bf16.mxu0 0
        %662 = vmatpush1.bf16.xpose.msra.mxu0 0
        %663 = vmatprep.subr.bf16.mxu0 0
        %664 = vmatpush1.bf16.xpose.msra.mxu0 0
        %665 = vmatprep.subr.bf16.mxu0 0
        %666 = vmatpush1.bf16.xpose.msra.mxu0 0
        %667 = vmatprep.mubr.bf16.mxu0 0
        %668 = vmatmul.mubr.bf16.gmra.mrb[0].mxu0 %v630
        %v669 = vpop.f32.mrb[0].mxu0
        %v670 = vadd.f32 0.0, %v669
        %v671 = vpop.f32.mrb[0].mxu0
        %v672 = vpop.f32.mrb[0].mxu0
        %v673 = vpop.f32.mrb[0].mxu0
        %674 = vdwg.mxu0
        %v675 = vsel %vm506, %v670, -inf
        %676 = vmax.xlane.f32.xlu0 %v675
        %v677 = vpop.xlane.xlu0 %676
        %v678 = vsub.f32 %v670, %v677
        %v679 = vmul.f32 %v678, 1.442695
        %v680 = vpow.pop %v679
        %v681 = vsel %vm506, %v680, 0.0
        %682 = vadd.xlane.f32.xlu0 %v681
        %v683 = vpop.xlane.xlu0 %682
        %v684 = vpack.c.bf16 %v680, %v680
        %685 = vrot.lane.b32.xlu0 %v626, 56
        %v686 = vpop.permute.xlu0 %685
        %v688 = vsel %vm506, %v684, 0
        %v691 = vsel %vm568, %v686, 0
        %693 = vmatprep.subr.bf16.mxu0 0
        %694 = vmatpush1.bf16.msra.mxu0 %v691
        %695 = vmatprep.subr.bf16.mxu0 0
        %696 = vmatpush1.bf16.msra.mxu0 0
        %697 = vmatprep.subr.bf16.mxu0 0
        %698 = vmatpush1.bf16.msra.mxu0 0
        %699 = vmatprep.subr.bf16.mxu0 0
        %700 = vmatpush1.bf16.msra.mxu0 0
        %701 = vmatprep.subr.bf16.mxu0 0
        %702 = vmatpush1.bf16.msra.mxu0 0
        %703 = vmatprep.subr.bf16.mxu0 0
        %704 = vmatpush1.bf16.msra.mxu0 0
        %705 = vmatprep.subr.bf16.mxu0 0
        %706 = vmatpush1.bf16.msra.mxu0 0
        %707 = vmatprep.subr.bf16.mxu0 0
        %708 = vmatpush1.bf16.msra.mxu0 0
        %709 = vmatprep.subr.bf16.mxu0 0
        %710 = vmatpush1.bf16.msra.mxu0 0
        %711 = vmatprep.subr.bf16.mxu0 0
        %712 = vmatpush1.bf16.msra.mxu0 0
        %713 = vmatprep.subr.bf16.mxu0 0
        %714 = vmatpush1.bf16.msra.mxu0 0
        %715 = vmatprep.subr.bf16.mxu0 0
        %716 = vmatpush1.bf16.msra.mxu0 0
        %717 = vmatprep.subr.bf16.mxu0 0
        %718 = vmatpush1.bf16.msra.mxu0 0
        %719 = vmatprep.subr.bf16.mxu0 0
        %720 = vmatpush1.bf16.msra.mxu0 0
        %721 = vmatprep.subr.bf16.mxu0 0
        %722 = vmatpush1.bf16.msra.mxu0 0
        %723 = vmatprep.subr.bf16.mxu0 0
        %724 = vmatpush1.bf16.msra.mxu0 0
        %725 = vmatprep.mubr.bf16.mxu0 0
        %726 = vmatmul.mubr.bf16.gmra.mrb[0].mxu0 %v688
        %v727 = vpop.f32.mrb[0].mxu0
        %v728 = vadd.f32 0.0, %v727
        %v729 = vpop.f32.mrb[0].mxu0
        %v730 = vpop.f32.mrb[0].mxu0
        %v731 = vpop.f32.mrb[0].mxu0
        %732 = vdwg.mxu0
        %v733 = vrcp.pop %v683
        %v734 = vmul.f32 %v728, %v733
        %v735 = vpack.c.bf16 %v734, %v734
        %v737 = vunpack.c.l.b16 %v735
        %v738 = vpack.c.b16 %v737, %v737
        %739 = vrot.lane.b32.xlu0 %v738, 8
        %v740 = vpop.permute.xlu0 %739
        %vm742 = vcmask 126016
        %743 = vst.msk [vmem:[#allocation3] sm:$0xf] %vm742, %v740
        %v744 = vld [vmem:[%s498] sm:$0xf]
        %v745 = vld [vmem:[#allocation2] sm:$0xf]
        %v747 = vunpack.c.l.b16 %v744
        %v748 = vpack.c.b16 %v747, %v747
        %749 = vrot.lane.b32.xlu0 %v748, 112
        %v750 = vpop.permute.xlu0 %749
        %v752 = vunpack.c.l.b16 %v745
        %v753 = vpack.c.b16 %v752, %v752
        %754 = vrot.lane.b32.xlu0 %v753, 80
        %v755 = vpop.permute.xlu0 %754
        %v757 = vsel %vm506, %v750, 0
        %v760 = vsel %vm506, %v755, 0
        %762 = vmatprep.subr.bf16.mxu0 0
        %763 = vmatpush1.bf16.xpose.msra.mxu0 %v760
        %764 = vmatprep.subr.bf16.mxu0 0
        %765 = vmatpush1.bf16.xpose.msra.mxu0 0
        %766 = vmatprep.subr.bf16.mxu0 0
        %767 = vmatpush1.bf16.xpose.msra.mxu0 0
        %768 = vmatprep.subr.bf16.mxu0 0
        %769 = vmatpush1.bf16.xpose.msra.mxu0 0
        %770 = vmatprep.subr.bf16.mxu0 0
        %771 = vmatpush1.bf16.xpose.msra.mxu0 0
        %772 = vmatprep.subr.bf16.mxu0 0
        %773 = vmatpush1.bf16.xpose.msra.mxu0 0
        %774 = vmatprep.subr.bf16.mxu0 0
        %775 = vmatpush1.bf16.xpose.msra.mxu0 0
        %776 = vmatprep.subr.bf16.mxu0 0
        %777 = vmatpush1.bf16.xpose.msra.mxu0 0
        %778 = vmatprep.subr.bf16.mxu0 0
        %779 = vmatpush1.bf16.xpose.msra.mxu0 0
        %780 = vmatprep.subr.bf16.mxu0 0
        %781 = vmatpush1.bf16.xpose.msra.mxu0 0
        %782 = vmatprep.subr.bf16.mxu0 0
        %783 = vmatpush1.bf16.xpose.msra.mxu0 0
        %784 = vmatprep.subr.bf16.mxu0 0
        %785 = vmatpush1.bf16.xpose.msra.mxu0 0
        %786 = vmatprep.subr.bf16.mxu0 0
        %787 = vmatpush1.bf16.xpose.msra.mxu0 0
        %788 = vmatprep.subr.bf16.mxu0 0
        %789 = vmatpush1.bf16.xpose.msra.mxu0 0
        %790 = vmatprep.subr.bf16.mxu0 0
        %791 = vmatpush1.bf16.xpose.msra.mxu0 0
        %792 = vmatprep.subr.bf16.mxu0 0
        %793 = vmatpush1.bf16.xpose.msra.mxu0 0
        %794 = vmatprep.mubr.bf16.mxu0 0
        %795 = vmatmul.mubr.bf16.gmra.mrb[0].mxu0 %v757
        %v796 = vpop.f32.mrb[0].mxu0
        %v797 = vadd.f32 0.0, %v796
        %v798 = vpop.f32.mrb[0].mxu0
        %v799 = vpop.f32.mrb[0].mxu0
        %v800 = vpop.f32.mrb[0].mxu0
        %801 = vdwg.mxu0
        %v802 = vsel %vm506, %v797, -inf
        %803 = vmax.xlane.f32.xlu0 %v802
        %v804 = vpop.xlane.xlu0 %803
        %v805 = vsub.f32 %v797, %v804
        %v806 = vmul.f32 %v805, 1.442695
        %v807 = vpow.pop %v806
        %v808 = vsel %vm506, %v807, 0.0
        %809 = vadd.xlane.f32.xlu0 %v808
        %v810 = vpop.xlane.xlu0 %809
        %v811 = vpack.c.bf16 %v807, %v807
        %812 = vrot.lane.b32.xlu0 %v753, 48
        %v813 = vpop.permute.xlu0 %812
        %v815 = vsel %vm506, %v811, 0
        %v818 = vsel %vm568, %v813, 0
        %820 = vmatprep.subr.bf16.mxu0 0
        %821 = vmatpush1.bf16.msra.mxu0 %v818
        %822 = vmatprep.subr.bf16.mxu0 0
        %823 = vmatpush1.bf16.msra.mxu0 0
        %824 = vmatprep.subr.bf16.mxu0 0
        %825 = vmatpush1.bf16.msra.mxu0 0
        %826 = vmatprep.subr.bf16.mxu0 0
        %827 = vmatpush1.bf16.msra.mxu0 0
        %828 = vmatprep.subr.bf16.mxu0 0
        %829 = vmatpush1.bf16.msra.mxu0 0
        %830 = vmatprep.subr.bf16.mxu0 0
        %831 = vmatpush1.bf16.msra.mxu0 0
        %832 = vmatprep.subr.bf16.mxu0 0
        %833 = vmatpush1.bf16.msra.mxu0 0
        %834 = vmatprep.subr.bf16.mxu0 0
        %835 = vmatpush1.bf16.msra.mxu0 0
        %836 = vmatprep.subr.bf16.mxu0 0
        %837 = vmatpush1.bf16.msra.mxu0 0
        %838 = vmatprep.subr.bf16.mxu0 0
        %839 = vmatpush1.bf16.msra.mxu0 0
        %840 = vmatprep.subr.bf16.mxu0 0
        %841 = vmatpush1.bf16.msra.mxu0 0
        %842 = vmatprep.subr.bf16.mxu0 0
        %843 = vmatpush1.bf16.msra.mxu0 0
        %844 = vmatprep.subr.bf16.mxu0 0
        %845 = vmatpush1.bf16.msra.mxu0 0
        %846 = vmatprep.subr.bf16.mxu0 0
        %847 = vmatpush1.bf16.msra.mxu0 0
        %848 = vmatprep.subr.bf16.mxu0 0
        %849 = vmatpush1.bf16.msra.mxu0 0
        %850 = vmatprep.subr.bf16.mxu0 0
        %851 = vmatpush1.bf16.msra.mxu0 0
        %852 = vmatprep.mubr.bf16.mxu0 0
        %853 = vmatmul.mubr.bf16.gmra.mrb[0].mxu0 %v815
        %v854 = vpop.f32.mrb[0].mxu0
        %v855 = vadd.f32 0.0, %v854
        %v856 = vpop.f32.mrb[0].mxu0
        %v857 = vpop.f32.mrb[0].mxu0
        %v858 = vpop.f32.mrb[0].mxu0
        %859 = vdwg.mxu0
        %v860 = vrcp.pop %v810
        %v861 = vmul.f32 %v855, %v860
        %v862 = vpack.c.bf16 %v861, %v861
        %v864 = vunpack.c.l.b16 %v862
        %v865 = vpack.c.b16 %v864, %v864
        %866 = vrot.lane.b32.xlu0 %v865, 16
        %v867 = vpop.permute.xlu0 %866
        %vm869 = vcmask 191616
        %870 = vst.msk [vmem:[#allocation3] sm:$0xf] %vm869, %v867
        %v871 = vld [vmem:[%s498] sm:$0xf]
        %v872 = vld [vmem:[#allocation2] sm:$0xf]
        %v874 = vunpack.c.l.b16 %v871
        %v875 = vpack.c.b16 %v874, %v874
        %876 = vrot.lane.b32.xlu0 %v875, 104
        %v877 = vpop.permute.xlu0 %876
        %v879 = vunpack.c.l.b16 %v872
        %v880 = vpack.c.b16 %v879, %v879
        %881 = vrot.lane.b32.xlu0 %v880, 72
        %v882 = vpop.permute.xlu0 %881
        %v884 = vsel %vm506, %v877, 0
        %v887 = vsel %vm506, %v882, 0
        %889 = vmatprep.subr.bf16.mxu0 0
        %890 = vmatpush1.bf16.xpose.msra.mxu0 %v887
        %891 = vmatprep.subr.bf16.mxu0 0
        %892 = vmatpush1.bf16.xpose.msra.mxu0 0
        %893 = vmatprep.subr.bf16.mxu0 0
        %894 = vmatpush1.bf16.xpose.msra.mxu0 0
        %895 = vmatprep.subr.bf16.mxu0 0
        %896 = vmatpush1.bf16.xpose.msra.mxu0 0
        %897 = vmatprep.subr.bf16.mxu0 0
        %898 = vmatpush1.bf16.xpose.msra.mxu0 0
        %899 = vmatprep.subr.bf16.mxu0 0
        %900 = vmatpush1.bf16.xpose.msra.mxu0 0
        %901 = vmatprep.subr.bf16.mxu0 0
        %902 = vmatpush1.bf16.xpose.msra.mxu0 0
        %903 = vmatprep.subr.bf16.mxu0 0
        %904 = vmatpush1.bf16.xpose.msra.mxu0 0
        %905 = vmatprep.subr.bf16.mxu0 0
        %906 = vmatpush1.bf16.xpose.msra.mxu0 0
        %907 = vmatprep.subr.bf16.mxu0 0
        %908 = vmatpush1.bf16.xpose.msra.mxu0 0
        %909 = vmatprep.subr.bf16.mxu0 0
        %910 = vmatpush1.bf16.xpose.msra.mxu0 0
        %911 = vmatprep.subr.bf16.mxu0 0
        %912 = vmatpush1.bf16.xpose.msra.mxu0 0
        %913 = vmatprep.subr.bf16.mxu0 0
        %914 = vmatpush1.bf16.xpose.msra.mxu0 0
        %915 = vmatprep.subr.bf16.mxu0 0
        %916 = vmatpush1.bf16.xpose.msra.mxu0 0
        %917 = vmatprep.subr.bf16.mxu0 0
        %918 = vmatpush1.bf16.xpose.msra.mxu0 0
        %919 = vmatprep.subr.bf16.mxu0 0
        %920 = vmatpush1.bf16.xpose.msra.mxu0 0
        %921 = vmatprep.mubr.bf16.mxu0 0
        %922 = vmatmul.mubr.bf16.gmra.mrb[0].mxu0 %v884
        %v923 = vpop.f32.mrb[0].mxu0
        %v924 = vadd.f32 0.0, %v923
        %v925 = vpop.f32.mrb[0].mxu0
        %v926 = vpop.f32.mrb[0].mxu0
        %v927 = vpop.f32.mrb[0].mxu0
        %928 = vdwg.mxu0
        %v929 = vsel %vm506, %v924, -inf
        %930 = vmax.xlane.f32.xlu0 %v929
        %v931 = vpop.xlane.xlu0 %930
        %v932 = vsub.f32 %v924, %v931
        %v933 = vmul.f32 %v932, 1.442695
        %v934 = vpow.pop %v933
        %v935 = vsel %vm506, %v934, 0.0
        %936 = vadd.xlane.f32.xlu0 %v935
        %v937 = vpop.xlane.xlu0 %936
        %v938 = vpack.c.bf16 %v934, %v934
        %939 = vrot.lane.b32.xlu0 %v880, 40
        %v940 = vpop.permute.xlu0 %939
        %v942 = vsel %vm506, %v938, 0
        %v945 = vsel %vm568, %v940, 0
        %947 = vmatprep.subr.bf16.mxu0 0
        %948 = vmatpush1.bf16.msra.mxu0 %v945
        %949 = vmatprep.subr.bf16.mxu0 0
        %950 = vmatpush1.bf16.msra.mxu0 0
        %951 = vmatprep.subr.bf16.mxu0 0
        %952 = vmatpush1.bf16.msra.mxu0 0
        %953 = vmatprep.subr.bf16.mxu0 0
        %954 = vmatpush1.bf16.msra.mxu0 0
        %955 = vmatprep.subr.bf16.mxu0 0
        %956 = vmatpush1.bf16.msra.mxu0 0
        %957 = vmatprep.subr.bf16.mxu0 0
        %958 = vmatpush1.bf16.msra.mxu0 0
        %959 = vmatprep.subr.bf16.mxu0 0
        %960 = vmatpush1.bf16.msra.mxu0 0
        %961 = vmatprep.subr.bf16.mxu0 0
        %962 = vmatpush1.bf16.msra.mxu0 0
        %963 = vmatprep.subr.bf16.mxu0 0
        %964 = vmatpush1.bf16.msra.mxu0 0
        %965 = vmatprep.subr.bf16.mxu0 0
        %966 = vmatpush1.bf16.msra.mxu0 0
        %967 = vmatprep.subr.bf16.mxu0 0
        %968 = vmatpush1.bf16.msra.mxu0 0
        %969 = vmatprep.subr.bf16.mxu0 0
        %970 = vmatpush1.bf16.msra.mxu0 0
        %971 = vmatprep.subr.bf16.mxu0 0
        %972 = vmatpush1.bf16.msra.mxu0 0
        %973 = vmatprep.subr.bf16.mxu0 0
        %974 = vmatpush1.bf16.msra.mxu0 0
        %975 = vmatprep.subr.bf16.mxu0 0
        %976 = vmatpush1.bf16.msra.mxu0 0
        %977 = vmatprep.subr.bf16.mxu0 0
        %978 = vmatpush1.bf16.msra.mxu0 0
        %979 = vmatprep.mubr.bf16.mxu0 0
        %980 = vmatmul.mubr.bf16.gmra.mrb[0].mxu0 %v942
        %v981 = vpop.f32.mrb[0].mxu0
        %v982 = vadd.f32 0.0, %v981
        %v983 = vpop.f32.mrb[0].mxu0
        %v984 = vpop.f32.mrb[0].mxu0
        %v985 = vpop.f32.mrb[0].mxu0
        %986 = vdwg.mxu0
        %v987 = vrcp.pop %v937
        %v988 = vmul.f32 %v982, %v987
        %v989 = vpack.c.bf16 %v988, %v988
        %v991 = vunpack.c.l.b16 %v989
        %v992 = vpack.c.b16 %v991, %v991
        %993 = vrot.lane.b32.xlu0 %v992, 24
        %v994 = vpop.permute.xlu0 %993
        %vm996 = vcmask 257216
        %997 = vst.msk [vmem:[#allocation3] sm:$0xf] %vm996, %v994
        %v998 = vld [vmem:[#allocation3] sm:$0xf]
        %v999 = vld [vmem:[#allocation13] sm:$0xf]
        %v1000 = vld [vmem:[#allocation13 + $0x4] sm:$0xf]
        %v1001 = vld [vmem:[#allocation13 + $0x8] sm:$0xf]
        %v1002 = vld [vmem:[#allocation13 + $0xc] sm:$0xf]
        %v1003 = vld [vmem:[#allocation15] sm:$0x1]
        %v1005 = vlaneseq
        %v1006 = vshrl.u32 %v1005, 7
        %v1007 = vsub.s32 0, %v1006
        %v1008 = vrot.slane %v1003, %v1007
        %v1014 = vunpack.c.l.b16 %v999
        %v1015 = vunpack.c.l.b16 %v1000
        %v1016 = vunpack.c.l.b16 %v1001
        %v1017 = vunpack.c.l.b16 %v1002
        %v1018 = vpack.c.b16 %v1015, %v1014
        %v1019 = vpack.c.b16 %v1017, %v1016
        %vm1022 = vcmask 261120
        %v1024 = vsel %vm1022, %v998, 0
        %1026 = vmatprep.subr.bf16.mxu0 0
        %1027 = vmatpush1.bf16.msra.mxu0 %v1018
        %1028 = vmatprep.subr.bf16.mxu0 0
        %1029 = vmatpush1.bf16.msra.mxu0 %v1019
        %1030 = vmatprep.subr.bf16.mxu0 0
        %1031 = vmatpush1.bf16.msra.mxu0 0
        %1032 = vmatprep.subr.bf16.mxu0 0
        %1033 = vmatpush1.bf16.msra.mxu0 0
        %1034 = vmatprep.subr.bf16.mxu0 0
        %1035 = vmatpush1.bf16.msra.mxu0 0
        %1036 = vmatprep.subr.bf16.mxu0 0
        %1037 = vmatpush1.bf16.msra.mxu0 0
        %1038 = vmatprep.subr.bf16.mxu0 0
        %1039 = vmatpush1.bf16.msra.mxu0 0
        %1040 = vmatprep.subr.bf16.mxu0 0
        %1041 = vmatpush1.bf16.msra.mxu0 0
        %1042 = vmatprep.subr.bf16.mxu0 0
        %1043 = vmatpush1.bf16.msra.mxu0 0
        %1044 = vmatprep.subr.bf16.mxu0 0
        %1045 = vmatpush1.bf16.msra.mxu0 0
        %1046 = vmatprep.subr.bf16.mxu0 0
        %1047 = vmatpush1.bf16.msra.mxu0 0
        %1048 = vmatprep.subr.bf16.mxu0 0
        %1049 = vmatpush1.bf16.msra.mxu0 0
        %1050 = vmatprep.subr.bf16.mxu0 0
        %1051 = vmatpush1.bf16.msra.mxu0 0
        %1052 = vmatprep.subr.bf16.mxu0 0
        %1053 = vmatpush1.bf16.msra.mxu0 0
        %1054 = vmatprep.subr.bf16.mxu0 0
        %1055 = vmatpush1.bf16.msra.mxu0 0
        %1056 = vmatprep.subr.bf16.mxu0 0
        %1057 = vmatpush1.bf16.msra.mxu0 0
        %1058 = vmatprep.mubr.bf16.mxu0 0
        %1059 = vmatmul.mubr.bf16.gmra.mrb[0].mxu0 %v1024
        %v1060 = vpop.f32.mrb[0].mxu0
        %v1061 = vadd.f32 %v1008, %v1060
        %v1062 = vpop.f32.mrb[0].mxu0
        %v1063 = vpop.f32.mrb[0].mxu0
        %v1064 = vpop.f32.mrb[0].mxu0
        %1065 = vdwg.mxu0
        %1066 = vst.msk [vmem:[%s386] sm:$0xff] %vm1022, %v1061
        %s1067 = sand.u32 %s201, 1
        %s1068 = scalar_lea.sflag [#allocation6], %s1067
        %s1069 = sand.u32 %s201, 1
        %s1070 = smul.addr %s1069, 8
        %s1071 = scalar_lea.vmem [#allocation16], %s1070
        // Predicated region
        $region81: #{tpu_custom_call.1} parent=47 // pred_check
          %p1072 = pneg %p211
        $region82: #{tpu_custom_call.1} parent=47 // pred_check_branch
          %1074 = sbr.rel (%p1072) target = $region84
        $region83: #{tpu_custom_call.1} parent=47 // pred_region
          %s1076 = ssub.s32 128, 128
          %1077 = vsyncadd %s1068, %s1076
          %s1078 = sadd.s32 %s32, %s31
          %s1079 = smul.addr %s1078, 128
          %s1080 = scalar_lea.hbm %s7, %s1079
          %s1082 = sshll.u32 %s1071, 4
          %s1083 = int_to_ptr.vmem [resolvable:$true] %s1082
          %1085 = dma.vmem_to_hbm [thread:$0]  %s1083, 128, %s1080, %s1068
        $region84: #{tpu_custom_call.1} parent=47 // pred_fallthru
          _
      $region48: #{tpu_custom_call.1} parent=5 // pred_fallthru
        _
      %p1086 = scmp.le.s32.totalorder 2, %s22
      // Predicated region
      $region85: #{tpu_custom_call.1} parent=5 // pred_check
        %p1087 = pneg %p1086
      $region86: #{tpu_custom_call.1} parent=5 // pred_check_branch
        %1089 = sbr.rel (%p1087) target = $region88
      $region87: #{tpu_custom_call.1} parent=5 // pred_region
        %s1090 = ssub.s32 %s22, 2
        // Predicated region
        $region89: #{tpu_custom_call.1} parent=87 // pred_check
          %p1091 = pneg %p217
        $region90: #{tpu_custom_call.1} parent=87 // pred_check_branch
          %1093 = sbr.rel (%p1091) target = $region92
        $region91: #{tpu_custom_call.1} parent=87 // pred_region
          %s1094 = sand.u32 %s202, 1
          %s1095 = scalar_lea.sflag [#allocation6], %s1094
          %s1096 = sand.u32 %s202, 1
          %s1097 = smul.addr %s1096, 8
          %s1098 = scalar_lea.vmem [#allocation16], %s1097
          %1099 = dma.done %s1095, 128
        $region92: #{tpu_custom_call.1} parent=87 // pred_fallthru
          _
      $region88: #{tpu_custom_call.1} parent=5 // pred_fallthru
        _
    $region6: #{tpu_custom_call.1} parent=1 // loop_footer
      %s26 = sadd.s32 1, %s22
    $region7: #{tpu_custom_call.1} parent=1 // loop_footer_branch
      %21 = sbr.rel target = $region3
    $region8: #{tpu_custom_call.1} parent=1 // loop_exit
      _
    %1100 = vsyncpa [#allocation5], 1
    %s1101 = scalar_lea.sflag [#allocation5], 1
    %1102 = vsyncpa %s1101, 1
    %1103 = vsyncpa [#allocation8], 1
    %1104 = vsyncpa [#allocation11], 1
    %1105 = vsyncpa [#allocation14], 1
    %1106 = vsyncpa [#allocation6], 1
    %s1107 = scalar_lea.sflag [#allocation6], 1
    %1108 = vsyncpa %s1107, 1

</llo_original>
